<compile_context>
chip_gen: v6e
topology: v6e:2x2x1
jax: 0.10.0
libtpu: 0.0.40
codegen_flags: <defaults>
</compile_context>

<pallas_src>
import functools
import math

import jax
import jax.numpy as jnp
from jax.experimental import pallas as pl
from jax.experimental.pallas import tpu as pltpu


def _round_up(x, m):
    return ((x + m - 1) // m) * m


def _fit_tile(extent, cap):
    """Largest 128-aligned tile <= cap such that padding waste is < 128."""
    nt = max(1, -(-extent // cap))          # ceil(extent / cap) tiles
    return _round_up(-(-extent // nt), 128)  # ceil(extent / nt), 128-aligned


def _tile_plan(n):
    """Generation-aware (tm, tk, vmem_limit_bytes) for an N x N adjacency."""
    n128 = _round_up(n, 128)
    try:
        vmem_cap = pltpu.get_tpu_info().vmem_capacity_bytes
    except Exception:
        vmem_cap = 64 * 1024 * 1024          # conservative (v7x-sized) fallback
    big_vmem = vmem_cap >= 96 * 1024 * 1024  # v5e / v6e (128 MiB); v7x is 64 MiB

    if n128 <= 2048:
        # Small-N fast path: single contraction step, no k-loop overhead.
        tk = n128
        if n128 >= 512 and n128 % 256 == 0:
            tm = n128 // 2                   # 2 row tiles, zero waste (v7x megacore)
        elif n128 >= 512 and not big_vmem:
            tm = _fit_tile(n128, _round_up(n128 // 2, 128))  # 2 tiles, <128 waste
        else:
            tm = n128
        vmem_limit = 32 * 1024 * 1024
    else:
        tm = _fit_tile(n128, 1024 if big_vmem else 512)
        tk = _fit_tile(n128, 8192 if big_vmem else 4096)
        vmem_limit = (96 if big_vmem else 32) * 1024 * 1024
    return tm, tk, vmem_limit


def _dense_gcn_kernel(a_ref, xk_ref, xr_ref, inv_deg_ref, w1_ref, w2_ref,
                      b_ref, o_ref, acc_ref, *, tk):
    k = pl.program_id(1)

    @pl.when(k == 0)
    def _init():
        acc_ref[...] = jnp.zeros_like(acc_ref)

    # int8 (0/1, exact) A tile -> bf16 on the VPU, then (tm, tk) @ (tk, F) on
    # the MXU with f32 accumulation.  X is fully resident; slice the k-chunk.
    a_tile = a_ref[...].astype(jnp.bfloat16)
    start = pl.multiple_of(k * tk, tk)
    x_k = xk_ref[pl.ds(start, tk), :]
    acc_ref[...] += jnp.dot(a_tile, x_k, preferred_element_type=jnp.float32)

    @pl.when(k == pl.num_programs(1) - 1)
    def _finalize():
        h_neigh = acc_ref[...] * inv_deg_ref[...]          # (tm, F) f32
        # temp @ W == X @ W[:F] + H_neigh @ W[F:]  (no hstack materialized).
        logits = (
            jnp.dot(xr_ref[...], w1_ref[...], preferred_element_type=jnp.float32)
            + jnp.dot(h_neigh, w2_ref[...], preferred_element_type=jnp.float32)
            + b_ref[...]
        )                                                  # (tm, O_pad)
        o_ref[...] = jax.nn.sigmoid(logits).astype(o_ref.dtype)


def dense_gcn_forward(node_feat, adjacency, indices, weight, bias, *, tiles=None):
    """Pallas wrapper. `indices` is unused by the reference forward pass."""
    del indices  # unused in the PyTorch forward
    n, f = node_feat.shape
    two_f, o = weight.shape
    assert two_f == 2 * f

    if tiles is None:
        tm, tk, vmem_limit = _tile_plan(n)
    else:
        tm, tk = tiles
        vmem_limit = 32 * 1024 * 1024

    n128 = _round_up(n, 128)
    n_pad_r = _round_up(n128, tm)   # independent row / column padding
    n_pad_c = _round_up(n128, tk)
    o_pad = _round_up(o, 128)       # lane-dense output stores

    # Single cast+pad of A to int8 (the only wrapper-side N^2 materialization);
    # 0/1 adjacency is exact in int8.  deg = ones(1,N) @ A as a column sum over
    # the padded int8 array with f32 accumulation (exact; padded rows are 0).
    a_i8 = jnp.pad(adjacency.astype(jnp.int8),
                   ((0, n_pad_r - n), (0, n_pad_c - n)))
    deg = jnp.sum(a_i8, axis=0, dtype=jnp.float32)         # [n_pad_c]
    # 1/deg is applied per OUTPUT ROW i (diag(1/deg) @ ...).  No zero-degree
    # guard (matches the PyTorch 1/deg exactly); padded rows get 0 -> finite.
    inv_deg = jnp.zeros((n_pad_r, 1), jnp.float32).at[:n, 0].set(1.0 / deg[:n])

    x32 = node_feat.astype(jnp.float32)
    x_k = jnp.pad(x32, ((0, n_pad_c - n), (0, 0))).astype(jnp.bfloat16)  # k-stream
    x_r = jnp.pad(x32, ((0, n_pad_r - n), (0, 0)))                        # epilogue f32

    w32 = weight.astype(jnp.float32)
    w1 = jnp.zeros((f, o_pad), jnp.float32).at[:, :o].set(w32[:f])
    w2 = jnp.zeros((f, o_pad), jnp.float32).at[:, :o].set(w32[f:])
    b_p = jnp.zeros((1, o_pad), jnp.float32).at[:, :o].set(
        bias.reshape(1, o).astype(jnp.float32))

    grid = (n_pad_r // tm, n_pad_c // tk)

    cost = pl.CostEstimate(
        flops=2 * n_pad_r * n_pad_c * f + 2 * n_pad_r * (2 * f) * o_pad,
        transcendentals=n_pad_r * o_pad,
        bytes_accessed=(n_pad_r * n_pad_c                 # A (int8)
                        + 2 * n_pad_c * f                 # X k-stream (bf16, once)
                        + 4 * n_pad_r * f                 # X row tiles (f32)
                        + 4 * n_pad_r                     # 1/deg
                        + 8 * f * o_pad + 4 * o_pad       # W halves + bias
                        + 4 * n_pad_r * o_pad),           # out (f32)
    )

    out_p = pl.pallas_call(
        functools.partial(_dense_gcn_kernel, tk=tk),
        out_shape=jax.ShapeDtypeStruct((n_pad_r, o_pad), jnp.float32),
        grid_spec=pltpu.PrefetchScalarGridSpec(
            num_scalar_prefetch=0,
            grid=grid,
            in_specs=[
                pl.BlockSpec((tm, tk), lambda i, k: (i, k)),       # A tile (int8)
                pl.BlockSpec((n_pad_c, f), lambda i, k: (0, 0)),   # X k-stream, resident bf16
                pl.BlockSpec((tm, f), lambda i, k: (i, 0)),        # X row tile (f32)
                pl.BlockSpec((tm, 1), lambda i, k: (i, 0)),        # 1/deg row tile
                pl.BlockSpec((f, o_pad), lambda i, k: (0, 0)),     # W[:F]  (col-padded)
                pl.BlockSpec((f, o_pad), lambda i, k: (0, 0)),     # W[F:]  (col-padded)
                pl.BlockSpec((1, o_pad), lambda i, k: (0, 0)),     # bias   (padded)
            ],
            out_specs=pl.BlockSpec((tm, o_pad), lambda i, k: (i, 0)),
            scratch_shapes=[pltpu.VMEM((tm, f), jnp.float32)],     # A@X accumulator
        ),
        compiler_params=pltpu.CompilerParams(
            dimension_semantics=("parallel", "arbitrary"),
            vmem_limit_bytes=vmem_limit,
        ),
        cost_estimate=cost,
    )(a_i8, x_k, x_r, inv_deg, w1, w2, b_p)

    return out_p[:n, :o]


def reference_forward(node_feat, adjacency, weight, bias):
    """Plain JAX mirror of the PyTorch forward (for correctness check)."""
    a = adjacency.astype(jnp.float32)
    deg = jnp.sum(a, axis=0)                     # ones(1,N) @ A
    h_neigh = (a @ node_feat) / deg[:, None]     # diag(1/deg) @ A @ X
    temp = jnp.concatenate([node_feat, h_neigh], axis=1)
    return jax.nn.sigmoid(temp @ weight + bias)


if __name__ == "__main__":
    # Small shapes consistent with the module: N nodes, F input features, O outputs.
    N, F, O = 300, 16, 8
    key = jax.random.PRNGKey(0)
    k_x, k_a, k_w, k_b = jax.random.split(key, 4)

    node_feat = jax.random.normal(k_x, (N, F), dtype=jnp.float32)

    # Random 0/1 adjacency with self-loops (guarantees nonzero degrees).
    adj = (jax.random.uniform(k_a, (N, N)) > 0.7).astype(jnp.float32)
    adj = jnp.maximum(adj, jnp.eye(N, dtype=jnp.float32))

    # Deterministic Xavier-uniform init (matches DenseGCN.initialize shapes/bounds).
    bound = math.sqrt(6.0 / float(2 * F + O))
    weight = jax.random.uniform(k_w, (2 * F, O), minval=-bound, maxval=bound,
                                dtype=jnp.float32)
    bias = jax.random.uniform(k_b, (O,), minval=-bound, maxval=bound,
                              dtype=jnp.float32)

    indices = jnp.arange(N, dtype=jnp.int32)  # unused by forward; kept for parity

    ref = reference_forward(node_feat, adj, weight, bias)

    # 1) Default plan: small-N fast path (single grid step, resident block).
    out = dense_gcn_forward(node_feat, adj, indices, weight, bias)
    out = jax.block_until_ready(out)
    assert out.shape == (N, O)
    max_err = float(jnp.max(jnp.abs(out - ref)))
    # bf16 MXU operand for X in A@X (f32 accumulation) -> relaxed tolerance.
    assert jnp.allclose(out, ref, atol=2e-2, rtol=1e-3), (
        f"fast-path mismatch vs. reference (max abs err {max_err})")

    # 2) Forced small tiles: exercises the multi-tile accumulation path
    #    (3x3 grid, pl.when init/finalize, resident-X dynamic k slicing).
    out2 = dense_gcn_forward(node_feat, adj, indices, weight, bias,
                             tiles=(128, 128))
    out2 = jax.block_until_ready(out2)
    max_err2 = float(jnp.max(jnp.abs(out2 - ref)))
    assert jnp.allclose(out2, ref, atol=2e-2, rtol=1e-3), (
        f"tiled-path mismatch vs. reference (max abs err {max_err2})")

    print("KERNEL_OK")
</pallas_src>

<mosaic_0001>
module attributes {stable_mosaic.version = 11 : i64} {
  func.func @_dense_gcn_kernel(%arg0: i32, %arg1: i32, %arg2: memref<384x384xi8, #tpu.memory_space<vmem>>, %arg3: memref<384x16xbf16, #tpu.memory_space<vmem>>, %arg4: memref<384x16xf32, #tpu.memory_space<vmem>>, %arg5: memref<384x1xf32, #tpu.memory_space<vmem>>, %arg6: memref<16x128xf32, #tpu.memory_space<vmem>>, %arg7: memref<16x128xf32, #tpu.memory_space<vmem>>, %arg8: memref<1x128xf32, #tpu.memory_space<vmem>>, %arg9: memref<384x128xf32, #tpu.memory_space<vmem>>, %arg10: memref<384x16xf32, #tpu.memory_space<vmem>>) attributes {dimension_semantics = [#tpu.dimension_semantics<parallel>, #tpu.dimension_semantics<arbitrary>], iteration_bounds = array<i64: 1, 1>, scalar_prefetch = 0 : i64, scratch_operands = 1 : i64, tpu.core_type = #tpu.core_type<tc>, window_params = [{transform_indices = @transform_0, window_bounds = array<i64: 384, 384>}, {pipeline_mode = #tpu.pipeline_mode<synchronous>, transform_indices = @transform_1, window_bounds = array<i64: 384, 16>}, {transform_indices = @transform_2, window_bounds = array<i64: 384, 16>}, {transform_indices = @transform_3, window_bounds = array<i64: 384, 1>}, {pipeline_mode = #tpu.pipeline_mode<synchronous>, transform_indices = @transform_4, window_bounds = array<i64: 16, 128>}, {pipeline_mode = #tpu.pipeline_mode<synchronous>, transform_indices = @transform_5, window_bounds = array<i64: 16, 128>}, {pipeline_mode = #tpu.pipeline_mode<synchronous>, transform_indices = @transform_6, window_bounds = array<i64: 1, 128>}, {transform_indices = @transform_7, window_bounds = array<i64: 384, 128>}]} {
    %c0_i32 = arith.constant 0 : i32
    %0 = arith.cmpi eq, %arg1, %c0_i32 : i32
    %1 = arith.extui %0 : i1 to i32
    %c0_i32_0 = arith.constant 0 : i32
    %2 = arith.cmpi ne, %1, %c0_i32_0 : i32
    scf.if %2 {
      %cst_9 = arith.constant 0.000000e+00 : f32
      %16 = vector.broadcast %cst_9 : f32 to vector<384x16xf32>
      %c0_10 = arith.constant 0 : index
      %c0_11 = arith.constant 0 : index
      %17 = vector.load %arg10[%c0_10, %c0_11] : memref<384x16xf32, #tpu.memory_space<vmem>>, vector<384x16xf32>
      tpu.vector_store %arg10[%c0_10, %c0_11], %16 {strides = array<i32>} : memref<384x16xf32, #tpu.memory_space<vmem>>, vector<384x16xf32>,
    } else {
    }
    %c0 = arith.constant 0 : index
    %c0_1 = arith.constant 0 : index
    %3 = vector.load %arg2[%c0, %c0_1] : memref<384x384xi8, #tpu.memory_space<vmem>>, vector<384x384xi8>
    %4 = arith.sitofp %3 : vector<384x384xi8> to vector<384x384xbf16>
    %c384_i32 = arith.constant 384 : i32
    %5 = arith.muli %arg1, %c384_i32 : i32
    %6 = tpu.assume_multiple %5, 384 : i32
    %7 = arith.index_cast %6 : i32 to index
    %c0_2 = arith.constant 0 : index
    %8 = vector.load %arg3[%7, %c0_2] : memref<384x16xbf16, #tpu.memory_space<vmem>>, vector<384x16xbf16>
    %c0_3 = arith.constant 0 : index
    %c0_4 = arith.constant 0 : index
    %9 = vector.load %arg10[%c0_3, %c0_4] : memref<384x16xf32, #tpu.memory_space<vmem>>, vector<384x16xf32>
    %cst = arith.constant dense<0.000000e+00> : vector<384x16xf32>
    %10 = tpu.matmul %4, %8, %cst {dimension_numbers = #tpu.dot_dimension_numbers<[1], [0], [0], [1], [0, 0, 1, 1], [], []>} : vector<384x384xbf16>, vector<384x16xbf16>, vector<384x16xf32> -> vector<384x16xf32>
    %11 = arith.addf %9, %10 : vector<384x16xf32>
    %c0_5 = arith.constant 0 : index
    %c0_6 = arith.constant 0 : index
    %12 = vector.load %arg10[%c0_5, %c0_6] : memref<384x16xf32, #tpu.memory_space<vmem>>, vector<384x16xf32>
    tpu.vector_store %arg10[%c0_5, %c0_6], %11 {strides = array<i32>} : memref<384x16xf32, #tpu.memory_space<vmem>>, vector<384x16xf32>,
    %c0_i32_7 = arith.constant 0 : i32
    %13 = arith.cmpi eq, %arg1, %c0_i32_7 : i32
    %14 = arith.extui %13 : i1 to i32
    %c0_i32_8 = arith.constant 0 : i32
    %15 = arith.cmpi ne, %14, %c0_i32_8 : i32
    scf.if %15 {
      %c0_9 = arith.constant 0 : index
      %c0_10 = arith.constant 0 : index
      %16 = vector.load %arg10[%c0_9, %c0_10] : memref<384x16xf32, #tpu.memory_space<vmem>>, vector<384x16xf32>
      %c0_11 = arith.constant 0 : index
      %c0_12 = arith.constant 0 : index
      %17 = vector.load %arg5[%c0_11, %c0_12] : memref<384x1xf32, #tpu.memory_space<vmem>>, vector<384x1xf32>
      %18 = vector.broadcast %17 : vector<384x1xf32> to vector<384x16xf32>
      %19 = arith.mulf %16, %18 : vector<384x16xf32>
      %c0_13 = arith.constant 0 : index
      %c0_14 = arith.constant 0 : index
      %20 = vector.load %arg4[%c0_13, %c0_14] : memref<384x16xf32, #tpu.memory_space<vmem>>, vector<384x16xf32>
      %c0_15 = arith.constant 0 : index
      %c0_16 = arith.constant 0 : index
      %21 = vector.load %arg6[%c0_15, %c0_16] : memref<16x128xf32, #tpu.memory_space<vmem>>, vector<16x128xf32>
      %cst_17 = arith.constant dense<0.000000e+00> : vector<384x128xf32>
      %22 = tpu.matmul %20, %21, %cst_17 {dimension_numbers = #tpu.dot_dimension_numbers<[1], [0], [0], [1], [0, 0, 1, 1], [], []>} : vector<384x16xf32>, vector<16x128xf32>, vector<384x128xf32> -> vector<384x128xf32>
      %c0_18 = arith.constant 0 : index
      %c0_19 = arith.constant 0 : index
      %23 = vector.load %arg7[%c0_18, %c0_19] : memref<16x128xf32, #tpu.memory_space<vmem>>, vector<16x128xf32>
      %cst_20 = arith.constant dense<0.000000e+00> : vector<384x128xf32>
      %24 = tpu.matmul %19, %23, %cst_20 {dimension_numbers = #tpu.dot_dimension_numbers<[1], [0], [0], [1], [0, 0, 1, 1], [], []>} : vector<384x16xf32>, vector<16x128xf32>, vector<384x128xf32> -> vector<384x128xf32>
      %25 = arith.addf %22, %24 : vector<384x128xf32>
      %c0_21 = arith.constant 0 : index
      %c0_22 = arith.constant 0 : index
      %26 = vector.load %arg8[%c0_21, %c0_22] : memref<1x128xf32, #tpu.memory_space<vmem>>, vector<1x128xf32>
      %27 = vector.broadcast %26 : vector<1x128xf32> to vector<384x128xf32>
      %28 = arith.addf %25, %27 : vector<384x128xf32>
      %29 = arith.negf %28 : vector<384x128xf32>
      %30 = math.exp %29 : vector<384x128xf32>
      %cst_23 = arith.constant 1.000000e+00 : f32
      %31 = vector.broadcast %cst_23 : f32 to vector<384x128xf32>
      %32 = arith.addf %31, %30 : vector<384x128xf32>
      %33 = arith.divf %31, %32 : vector<384x128xf32>
      %c0_24 = arith.constant 0 : index
      %c0_25 = arith.constant 0 : index
      %34 = vector.load %arg9[%c0_24, %c0_25] : memref<384x128xf32, #tpu.memory_space<vmem>>, vector<384x128xf32>
      tpu.vector_store %arg9[%c0_24, %c0_25], %33 {strides = array<i32>} : memref<384x128xf32, #tpu.memory_space<vmem>>, vector<384x128xf32>,
    } else {
    }
    return
  }
  func.func @transform_0(%arg0: i32, %arg1: i32) -> (i32, i32) {
    %c0_i32 = arith.constant 0 : i32
    return %arg0, %arg1 : i32, i32
  }
  func.func @transform_1(%arg0: i32, %arg1: i32) -> (i32, i32) {
    %c0_i32 = arith.constant 0 : i32
    %c0_i32_0 = arith.constant 0 : i32
    %c0_i32_1 = arith.constant 0 : i32
    return %c0_i32, %c0_i32_0 : i32, i32
  }
  func.func @transform_2(%arg0: i32, %arg1: i32) -> (i32, i32) {
    %c0_i32 = arith.constant 0 : i32
    %c0_i32_0 = arith.constant 0 : i32
    return %arg0, %c0_i32 : i32, i32
  }
  func.func @transform_3(%arg0: i32, %arg1: i32) -> (i32, i32) {
    %c0_i32 = arith.constant 0 : i32
    %c0_i32_0 = arith.constant 0 : i32
    return %arg0, %c0_i32 : i32, i32
  }
  func.func @transform_4(%arg0: i32, %arg1: i32) -> (i32, i32) {
    %c0_i32 = arith.constant 0 : i32
    %c0_i32_0 = arith.constant 0 : i32
    %c0_i32_1 = arith.constant 0 : i32
    return %c0_i32, %c0_i32_0 : i32, i32
  }
  func.func @transform_5(%arg0: i32, %arg1: i32) -> (i32, i32) {
    %c0_i32 = arith.constant 0 : i32
    %c0_i32_0 = arith.constant 0 : i32
    %c0_i32_1 = arith.constant 0 : i32
    return %c0_i32, %c0_i32_0 : i32, i32
  }
  func.func @transform_6(%arg0: i32, %arg1: i32) -> (i32, i32) {
    %c0_i32 = arith.constant 0 : i32
    %c0_i32_0 = arith.constant 0 : i32
    %c0_i32_1 = arith.constant 0 : i32
    return %c0_i32, %c0_i32_0 : i32, i32
  }
  func.func @transform_7(%arg0: i32, %arg1: i32) -> (i32, i32) {
    %c0_i32 = arith.constant 0 : i32
    %c0_i32_0 = arith.constant 0 : i32
    return %arg0, %c0_i32 : i32, i32
  }
}

</mosaic_0001>

<llo_original>
// kernel: tpu_custom_call.1
$region0: #{tpu_custom_call.1}
  #allocation0 [shape = 'u32[]', space=smem, size = 0x4, offset = 0x4, fixed_abs, tag = 'smem constant byte address 0x4 - core index']
  #allocation1 [shape = 'u32[144,128]{1,0:T(1,128)}', space=vmem, size = 0x12000, scoped, tag = 'internal scratch']
  #allocation2 [shape = 'f32[384,16]{1,0:T(8,128)}', space=vmem, size = 0x30000, scoped, tag = 'scratch operand']
  %s0 = inlined_call_operand.vmem [shape: s8[384,384], index: 0, kind: input, shape index: {}]
  %s1 = inlined_call_operand.vmem [shape: bf16[384,16], index: 1, kind: input, shape index: {}]
  %s2 = inlined_call_operand.vmem [shape: f32[384,16], index: 2, kind: input, shape index: {}]
  %s3 = inlined_call_operand.vmem [shape: f32[384,1], index: 3, kind: input, shape index: {}]
  %s4 = inlined_call_operand.vmem [shape: f32[16,128], index: 4, kind: input, shape index: {}]
  %s5 = inlined_call_operand.vmem [shape: f32[16,128], index: 5, kind: input, shape index: {}]
  %s6 = inlined_call_operand.vmem [shape: f32[1,128], index: 6, kind: input, shape index: {}]
  %s7 = inlined_call_operand.hbm [shape: f32[384,128], index: 7, kind: output, shape index: {}]
  %s8 = sld [smem:[#allocation0]]
  $region46: #{tpu_custom_call.1} parent=0
    _
  %s10 = ssub.s32 1, %s8
  %s11 = scalar_select 0, %s10, %s8
  $region1: #{tpu_custom_call.1} parent=0
    #allocation3 [shape = 'u8[196608]{0}', space=vmem, size = 0x30000, scoped, tag = 'output window, operand 0, single buffered']
    #allocation4 [shape = 's32[1]{0}', space=sflag, size = 0x4, scoped, tag = 'scoped memory for tpu_custom_call.1']
    %12 = vsyncpa [#allocation4], 0
    // Predicated region
    $region2: #{tpu_custom_call.1} parent=1 // pred_check
      _
    $region3: #{tpu_custom_call.1} parent=1 // pred_check_branch
      %14 = sbr.rel (0) target = $region5
    $region4: #{tpu_custom_call.1} parent=1 // pred_region
      _
    $region5: #{tpu_custom_call.1} parent=1 // pred_fallthru
      _
    // Predicated region
    $region6: #{tpu_custom_call.1} parent=1 // pred_check
      _
    $region7: #{tpu_custom_call.1} parent=1 // pred_check_branch
      %16 = sbr.rel (0) target = $region9
    $region8: #{tpu_custom_call.1} parent=1 // pred_region
      _
    $region9: #{tpu_custom_call.1} parent=1 // pred_fallthru
      _
    // Predicated region
    $region10: #{tpu_custom_call.1} parent=1 // pred_check
      _
    $region11: #{tpu_custom_call.1} parent=1 // pred_check_branch
      %18 = sbr.rel (0) target = $region13
    $region12: #{tpu_custom_call.1} parent=1 // pred_region
      _
    $region13: #{tpu_custom_call.1} parent=1 // pred_fallthru
      _
    // Predicated region
    $region14: #{tpu_custom_call.1} parent=1 // pred_check
      _
    $region15: #{tpu_custom_call.1} parent=1 // pred_check_branch
      %20 = sbr.rel (0) target = $region17
    $region16: #{tpu_custom_call.1} parent=1 // pred_region
      _
    $region17: #{tpu_custom_call.1} parent=1 // pred_fallthru
      _
    // Predicated region
    $region18: #{tpu_custom_call.1} parent=1 // pred_check
      _
    $region19: #{tpu_custom_call.1} parent=1 // pred_check_branch
      %22 = sbr.rel (0) target = $region21
    $region20: #{tpu_custom_call.1} parent=1 // pred_region
      _
    $region21: #{tpu_custom_call.1} parent=1 // pred_fallthru
      _
    // Predicated region
    $region22: #{tpu_custom_call.1} parent=1 // pred_check
      _
    $region23: #{tpu_custom_call.1} parent=1 // pred_check_branch
      %24 = sbr.rel (0) target = $region25
    $region24: #{tpu_custom_call.1} parent=1 // pred_region
      _
    $region25: #{tpu_custom_call.1} parent=1 // pred_fallthru
      _
    // Predicated region
    $region26: #{tpu_custom_call.1} parent=1 // pred_check
      _
    $region27: #{tpu_custom_call.1} parent=1 // pred_check_branch
      %26 = sbr.rel (0) target = $region29
    $region28: #{tpu_custom_call.1} parent=1 // pred_region
      _
    $region29: #{tpu_custom_call.1} parent=1 // pred_fallthru
      _
    %p28 = scmp.eq.s32.totalorder 0, 0
    // Predicated region
    $region30: #{tpu_custom_call.1} parent=1 // pred_check
      %p29 = pneg %p28
    $region31: #{tpu_custom_call.1} parent=1 // pred_check_branch
      %31 = sbr.rel (%p29) target = $region33
    $region32: #{tpu_custom_call.1} parent=1 // pred_region
      %vm32 = vcmask 130048
      %33 = vst.msk [vmem:[#allocation2] sm:$0xff] %vm32, 0.0
      %34 = vst.msk [vmem:[#allocation2 + $0x8] sm:$0xff] %vm32, 0.0
      %35 = vst.msk [vmem:[#allocation2 + $0x10] sm:$0xff] %vm32, 0.0
      %36 = vst.msk [vmem:[#allocation2 + $0x18] sm:$0xff] %vm32, 0.0
      %37 = vst.msk [vmem:[#allocation2 + $0x20] sm:$0xff] %vm32, 0.0
      %38 = vst.msk [vmem:[#allocation2 + $0x28] sm:$0xff] %vm32, 0.0
      %39 = vst.msk [vmem:[#allocation2 + $0x30] sm:$0xff] %vm32, 0.0
      %40 = vst.msk [vmem:[#allocation2 + $0x38] sm:$0xff] %vm32, 0.0
      %41 = vst.msk [vmem:[#allocation2 + $0x40] sm:$0xff] %vm32, 0.0
      %42 = vst.msk [vmem:[#allocation2 + $0x48] sm:$0xff] %vm32, 0.0
      %43 = vst.msk [vmem:[#allocation2 + $0x50] sm:$0xff] %vm32, 0.0
      %44 = vst.msk [vmem:[#allocation2 + $0x58] sm:$0xff] %vm32, 0.0
      %45 = vst.msk [vmem:[#allocation2 + $0x60] sm:$0xff] %vm32, 0.0
      %46 = vst.msk [vmem:[#allocation2 + $0x68] sm:$0xff] %vm32, 0.0
      %47 = vst.msk [vmem:[#allocation2 + $0x70] sm:$0xff] %vm32, 0.0
      %48 = vst.msk [vmem:[#allocation2 + $0x78] sm:$0xff] %vm32, 0.0
      %49 = vst.msk [vmem:[#allocation2 + $0x80] sm:$0xff] %vm32, 0.0
      %50 = vst.msk [vmem:[#allocation2 + $0x88] sm:$0xff] %vm32, 0.0
      %51 = vst.msk [vmem:[#allocation2 + $0x90] sm:$0xff] %vm32, 0.0
      %52 = vst.msk [vmem:[#allocation2 + $0x98] sm:$0xff] %vm32, 0.0
      %53 = vst.msk [vmem:[#allocation2 + $0xa0] sm:$0xff] %vm32, 0.0
      %54 = vst.msk [vmem:[#allocation2 + $0xa8] sm:$0xff] %vm32, 0.0
      %55 = vst.msk [vmem:[#allocation2 + $0xb0] sm:$0xff] %vm32, 0.0
      %56 = vst.msk [vmem:[#allocation2 + $0xb8] sm:$0xff] %vm32, 0.0
      %57 = vst.msk [vmem:[#allocation2 + $0xc0] sm:$0xff] %vm32, 0.0
      %58 = vst.msk [vmem:[#allocation2 + $0xc8] sm:$0xff] %vm32, 0.0
      %59 = vst.msk [vmem:[#allocation2 + $0xd0] sm:$0xff] %vm32, 0.0
      %60 = vst.msk [vmem:[#allocation2 + $0xd8] sm:$0xff] %vm32, 0.0
      %61 = vst.msk [vmem:[#allocation2 + $0xe0] sm:$0xff] %vm32, 0.0
      %62 = vst.msk [vmem:[#allocation2 + $0xe8] sm:$0xff] %vm32, 0.0
      %63 = vst.msk [vmem:[#allocation2 + $0xf0] sm:$0xff] %vm32, 0.0
      %64 = vst.msk [vmem:[#allocation2 + $0xf8] sm:$0xff] %vm32, 0.0
      %65 = vst.msk [vmem:[#allocation2 + $0x100] sm:$0xff] %vm32, 0.0
      %66 = vst.msk [vmem:[#allocation2 + $0x108] sm:$0xff] %vm32, 0.0
      %67 = vst.msk [vmem:[#allocation2 + $0x110] sm:$0xff] %vm32, 0.0
      %68 = vst.msk [vmem:[#allocation2 + $0x118] sm:$0xff] %vm32, 0.0
      %69 = vst.msk [vmem:[#allocation2 + $0x120] sm:$0xff] %vm32, 0.0
      %70 = vst.msk [vmem:[#allocation2 + $0x128] sm:$0xff] %vm32, 0.0
      %71 = vst.msk [vmem:[#allocation2 + $0x130] sm:$0xff] %vm32, 0.0
      %72 = vst.msk [vmem:[#allocation2 + $0x138] sm:$0xff] %vm32, 0.0
      %73 = vst.msk [vmem:[#allocation2 + $0x140] sm:$0xff] %vm32, 0.0
      %74 = vst.msk [vmem:[#allocation2 + $0x148] sm:$0xff] %vm32, 0.0
      %75 = vst.msk [vmem:[#allocation2 + $0x150] sm:$0xff] %vm32, 0.0
      %76 = vst.msk [vmem:[#allocation2 + $0x158] sm:$0xff] %vm32, 0.0
      %77 = vst.msk [vmem:[#allocation2 + $0x160] sm:$0xff] %vm32, 0.0
      %78 = vst.msk [vmem:[#allocation2 + $0x168] sm:$0xff] %vm32, 0.0
      %79 = vst.msk [vmem:[#allocation2 + $0x170] sm:$0xff] %vm32, 0.0
      %80 = vst.msk [vmem:[#allocation2 + $0x178] sm:$0xff] %vm32, 0.0
    $region33: #{tpu_custom_call.1} parent=1 // pred_fallthru
      _
    %v81 = vld [vmem:[%s0] sm:$0xff]
    %v82 = vld [vmem:[%s0 + $0x8] sm:$0xff]
    %v83 = vld [vmem:[%s0 + $0x10] sm:$0xff]
    %v84 = vld [vmem:[%s0 + $0x18] sm:$0xff]
    %v85 = vld [vmem:[%s0 + $0x20] sm:$0xff]
    %v86 = vld [vmem:[%s0 + $0x28] sm:$0xff]
    %v87 = vld [vmem:[%s0 + $0x30] sm:$0xff]
    %v88 = vld [vmem:[%s0 + $0x38] sm:$0xff]
    %v89 = vld [vmem:[%s0 + $0x40] sm:$0xff]
    %v90 = vld [vmem:[%s0 + $0x48] sm:$0xff]
    %v91 = vld [vmem:[%s0 + $0x50] sm:$0xff]
    %v92 = vld [vmem:[%s0 + $0x58] sm:$0xff]
    %v93 = vld [vmem:[%s0 + $0x60] sm:$0xff]
    %v94 = vld [vmem:[%s0 + $0x68] sm:$0xff]
    %v95 = vld [vmem:[%s0 + $0x70] sm:$0xff]
    %v96 = vld [vmem:[%s0 + $0x78] sm:$0xff]
    %v97 = vld [vmem:[%s0 + $0x80] sm:$0xff]
    %v98 = vld [vmem:[%s0 + $0x88] sm:$0xff]
    %v99 = vld [vmem:[%s0 + $0x90] sm:$0xff]
    %v100 = vld [vmem:[%s0 + $0x98] sm:$0xff]
    %v101 = vld [vmem:[%s0 + $0xa0] sm:$0xff]
    %v102 = vld [vmem:[%s0 + $0xa8] sm:$0xff]
    %v103 = vld [vmem:[%s0 + $0xb0] sm:$0xff]
    %v104 = vld [vmem:[%s0 + $0xb8] sm:$0xff]
    %v105 = vld [vmem:[%s0 + $0xc0] sm:$0xff]
    %v106 = vld [vmem:[%s0 + $0xc8] sm:$0xff]
    %v107 = vld [vmem:[%s0 + $0xd0] sm:$0xff]
    %v108 = vld [vmem:[%s0 + $0xd8] sm:$0xff]
    %v109 = vld [vmem:[%s0 + $0xe0] sm:$0xff]
    %v110 = vld [vmem:[%s0 + $0xe8] sm:$0xff]
    %v111 = vld [vmem:[%s0 + $0xf0] sm:$0xff]
    %v112 = vld [vmem:[%s0 + $0xf8] sm:$0xff]
    %v113 = vld [vmem:[%s0 + $0x100] sm:$0xff]
    %v114 = vld [vmem:[%s0 + $0x108] sm:$0xff]
    %v115 = vld [vmem:[%s0 + $0x110] sm:$0xff]
    %v116 = vld [vmem:[%s0 + $0x118] sm:$0xff]
    %v117 = vunpack.c.l.s8.bf16 %v81
    %v118 = vunpack.c.l.s8.bf16 %v82
    %v119 = vunpack.c.l.s8.bf16 %v83
    %v120 = vunpack.c.h.s8.bf16 %v81
    %v121 = vunpack.c.h.s8.bf16 %v82
    %v122 = vunpack.c.h.s8.bf16 %v83
    %v123 = vunpack.c.l.s8.bf16 %v84
    %v124 = vunpack.c.l.s8.bf16 %v85
    %v125 = vunpack.c.l.s8.bf16 %v86
    %v126 = vunpack.c.h.s8.bf16 %v84
    %v127 = vunpack.c.h.s8.bf16 %v85
    %v128 = vunpack.c.h.s8.bf16 %v86
    %v129 = vunpack.c.l.s8.bf16 %v87
    %v130 = vunpack.c.l.s8.bf16 %v88
    %v131 = vunpack.c.l.s8.bf16 %v89
    %v132 = vunpack.c.h.s8.bf16 %v87
    %v133 = vunpack.c.h.s8.bf16 %v88
    %v134 = vunpack.c.h.s8.bf16 %v89
    %v135 = vunpack.c.l.s8.bf16 %v90
    %v136 = vunpack.c.l.s8.bf16 %v91
    %v137 = vunpack.c.l.s8.bf16 %v92
    %v138 = vunpack.c.h.s8.bf16 %v90
    %v139 = vunpack.c.h.s8.bf16 %v91
    %v140 = vunpack.c.h.s8.bf16 %v92
    %v141 = vunpack.c.l.s8.bf16 %v93
    %v142 = vunpack.c.l.s8.bf16 %v94
    %v143 = vunpack.c.l.s8.bf16 %v95
    %v144 = vunpack.c.h.s8.bf16 %v93
    %v145 = vunpack.c.h.s8.bf16 %v94
    %v146 = vunpack.c.h.s8.bf16 %v95
    %v147 = vunpack.c.l.s8.bf16 %v96
    %v148 = vunpack.c.l.s8.bf16 %v97
    %v149 = vunpack.c.l.s8.bf16 %v98
    %v150 = vunpack.c.h.s8.bf16 %v96
    %v151 = vunpack.c.h.s8.bf16 %v97
    %v152 = vunpack.c.h.s8.bf16 %v98
    %v153 = vunpack.c.l.s8.bf16 %v99
    %v154 = vunpack.c.l.s8.bf16 %v100
    %v155 = vunpack.c.l.s8.bf16 %v101
    %v156 = vunpack.c.h.s8.bf16 %v99
    %v157 = vunpack.c.h.s8.bf16 %v100
    %v158 = vunpack.c.h.s8.bf16 %v101
    %v159 = vunpack.c.l.s8.bf16 %v102
    %v160 = vunpack.c.l.s8.bf16 %v103
    %v161 = vunpack.c.l.s8.bf16 %v104
    %v162 = vunpack.c.h.s8.bf16 %v102
    %v163 = vunpack.c.h.s8.bf16 %v103
    %v164 = vunpack.c.h.s8.bf16 %v104
    %v165 = vunpack.c.l.s8.bf16 %v105
    %v166 = vunpack.c.l.s8.bf16 %v106
    %v167 = vunpack.c.l.s8.bf16 %v107
    %v168 = vunpack.c.h.s8.bf16 %v105
    %v169 = vunpack.c.h.s8.bf16 %v106
    %v170 = vunpack.c.h.s8.bf16 %v107
    %v171 = vunpack.c.l.s8.bf16 %v108
    %v172 = vunpack.c.l.s8.bf16 %v109
    %v173 = vunpack.c.l.s8.bf16 %v110
    %v174 = vunpack.c.h.s8.bf16 %v108
    %v175 = vunpack.c.h.s8.bf16 %v109
    %v176 = vunpack.c.h.s8.bf16 %v110
    %v177 = vunpack.c.l.s8.bf16 %v111
    %v178 = vunpack.c.l.s8.bf16 %v112
    %v179 = vunpack.c.l.s8.bf16 %v113
    %v180 = vunpack.c.h.s8.bf16 %v111
    %v181 = vunpack.c.h.s8.bf16 %v112
    %v182 = vunpack.c.h.s8.bf16 %v113
    %v183 = vunpack.c.l.s8.bf16 %v114
    %v184 = vunpack.c.l.s8.bf16 %v115
    %v185 = vunpack.c.l.s8.bf16 %v116
    %v186 = vunpack.c.h.s8.bf16 %v114
    %v187 = vunpack.c.h.s8.bf16 %v115
    %v188 = vunpack.c.h.s8.bf16 %v116
    %s189 = smul.u32 0, 384
    %s190 = sshra.s32 %s189, 3
    %s191 = sand.u32 %s189, 7
    %s192 = smul.addr %s190, 4
    %s193 = scalar_lea.vmem %s1, %s192
    %v194 = vld [vmem:[%s193] sm:$0xf]
    %v195 = vld [vmem:[%s193 + $0x4] sm:$0xf]
    %v196 = vld [vmem:[%s193 + $0x8] sm:$0xf]
    %v197 = vld [vmem:[%s193 + $0xc] sm:$0xf]
    %v198 = vld [vmem:[%s193 + $0x10] sm:$0xf]
    %v199 = vld [vmem:[%s193 + $0x14] sm:$0xf]
    %v200 = vld [vmem:[%s193 + $0x18] sm:$0xf]
    %v201 = vld [vmem:[%s193 + $0x1c] sm:$0xf]
    %v202 = vld [vmem:[%s193 + $0x20] sm:$0xf]
    %v203 = vld [vmem:[%s193 + $0x24] sm:$0xf]
    %v204 = vld [vmem:[%s193 + $0x28] sm:$0xf]
    %v205 = vld [vmem:[%s193 + $0x2c] sm:$0xf]
    %v206 = vld [vmem:[%s193 + $0x30] sm:$0xf]
    %v207 = vld [vmem:[%s193 + $0x34] sm:$0xf]
    %v208 = vld [vmem:[%s193 + $0x38] sm:$0xf]
    %v209 = vld [vmem:[%s193 + $0x3c] sm:$0xf]
    %v210 = vld [vmem:[%s193 + $0x40] sm:$0xf]
    %v211 = vld [vmem:[%s193 + $0x44] sm:$0xf]
    %v212 = vld [vmem:[%s193 + $0x48] sm:$0xf]
    %v213 = vld [vmem:[%s193 + $0x4c] sm:$0xf]
    %v214 = vld [vmem:[%s193 + $0x50] sm:$0xf]
    %v215 = vld [vmem:[%s193 + $0x54] sm:$0xf]
    %v216 = vld [vmem:[%s193 + $0x58] sm:$0xf]
    %v217 = vld [vmem:[%s193 + $0x5c] sm:$0xf]
    %v218 = vld [vmem:[%s193 + $0x60] sm:$0xf]
    %v219 = vld [vmem:[%s193 + $0x64] sm:$0xf]
    %v220 = vld [vmem:[%s193 + $0x68] sm:$0xf]
    %v221 = vld [vmem:[%s193 + $0x6c] sm:$0xf]
    %v222 = vld [vmem:[%s193 + $0x70] sm:$0xf]
    %v223 = vld [vmem:[%s193 + $0x74] sm:$0xf]
    %v224 = vld [vmem:[%s193 + $0x78] sm:$0xf]
    %v225 = vld [vmem:[%s193 + $0x7c] sm:$0xf]
    %v226 = vld [vmem:[%s193 + $0x80] sm:$0xf]
    %v227 = vld [vmem:[%s193 + $0x84] sm:$0xf]
    %v228 = vld [vmem:[%s193 + $0x88] sm:$0xf]
    %v229 = vld [vmem:[%s193 + $0x8c] sm:$0xf]
    %v230 = vld [vmem:[%s193 + $0x90] sm:$0xf]
    %v231 = vld [vmem:[%s193 + $0x94] sm:$0xf]
    %v232 = vld [vmem:[%s193 + $0x98] sm:$0xf]
    %v233 = vld [vmem:[%s193 + $0x9c] sm:$0xf]
    %v234 = vld [vmem:[%s193 + $0xa0] sm:$0xf]
    %v235 = vld [vmem:[%s193 + $0xa4] sm:$0xf]
    %v236 = vld [vmem:[%s193 + $0xa8] sm:$0xf]
    %v237 = vld [vmem:[%s193 + $0xac] sm:$0xf]
    %v238 = vld [vmem:[%s193 + $0xb0] sm:$0xf]
    %v239 = vld [vmem:[%s193 + $0xb4] sm:$0xf]
    %v240 = vld [vmem:[%s193 + $0xb8] sm:$0xf]
    %v241 = vld [vmem:[%s193 + $0xbc] sm:$0xf]
    %v242 = vld [vmem:[#allocation2] sm:$0xff]
    %v243 = vld [vmem:[#allocation2 + $0x8] sm:$0xff]
    %v244 = vld [vmem:[#allocation2 + $0x10] sm:$0xff]
    %v245 = vld [vmem:[#allocation2 + $0x18] sm:$0xff]
    %v246 = vld [vmem:[#allocation2 + $0x20] sm:$0xff]
    %v247 = vld [vmem:[#allocation2 + $0x28] sm:$0xff]
    %v248 = vld [vmem:[#allocation2 + $0x30] sm:$0xff]
    %v249 = vld [vmem:[#allocation2 + $0x38] sm:$0xff]
    %v250 = vld [vmem:[#allocation2 + $0x40] sm:$0xff]
    %v251 = vld [vmem:[#allocation2 + $0x48] sm:$0xff]
    %v252 = vld [vmem:[#allocation2 + $0x50] sm:$0xff]
    %v253 = vld [vmem:[#allocation2 + $0x58] sm:$0xff]
    %v254 = vld [vmem:[#allocation2 + $0x60] sm:$0xff]
    %v255 = vld [vmem:[#allocation2 + $0x68] sm:$0xff]
    %v256 = vld [vmem:[#allocation2 + $0x70] sm:$0xff]
    %v257 = vld [vmem:[#allocation2 + $0x78] sm:$0xff]
    %v258 = vld [vmem:[#allocation2 + $0x80] sm:$0xff]
    %v259 = vld [vmem:[#allocation2 + $0x88] sm:$0xff]
    %v260 = vld [vmem:[#allocation2 + $0x90] sm:$0xff]
    %v261 = vld [vmem:[#allocation2 + $0x98] sm:$0xff]
    %v262 = vld [vmem:[#allocation2 + $0xa0] sm:$0xff]
    %v263 = vld [vmem:[#allocation2 + $0xa8] sm:$0xff]
    %v264 = vld [vmem:[#allocation2 + $0xb0] sm:$0xff]
    %v265 = vld [vmem:[#allocation2 + $0xb8] sm:$0xff]
    %v266 = vld [vmem:[#allocation2 + $0xc0] sm:$0xff]
    %v267 = vld [vmem:[#allocation2 + $0xc8] sm:$0xff]
    %v268 = vld [vmem:[#allocation2 + $0xd0] sm:$0xff]
    %v269 = vld [vmem:[#allocation2 + $0xd8] sm:$0xff]
    %v270 = vld [vmem:[#allocation2 + $0xe0] sm:$0xff]
    %v271 = vld [vmem:[#allocation2 + $0xe8] sm:$0xff]
    %v272 = vld [vmem:[#allocation2 + $0xf0] sm:$0xff]
    %v273 = vld [vmem:[#allocation2 + $0xf8] sm:$0xff]
    %v274 = vld [vmem:[#allocation2 + $0x100] sm:$0xff]
    %v275 = vld [vmem:[#allocation2 + $0x108] sm:$0xff]
    %v276 = vld [vmem:[#allocation2 + $0x110] sm:$0xff]
    %v277 = vld [vmem:[#allocation2 + $0x118] sm:$0xff]
    %v278 = vld [vmem:[#allocation2 + $0x120] sm:$0xff]
    %v279 = vld [vmem:[#allocation2 + $0x128] sm:$0xff]
    %v280 = vld [vmem:[#allocation2 + $0x130] sm:$0xff]
    %v281 = vld [vmem:[#allocation2 + $0x138] sm:$0xff]
    %v282 = vld [vmem:[#allocation2 + $0x140] sm:$0xff]
    %v283 = vld [vmem:[#allocation2 + $0x148] sm:$0xff]
    %v284 = vld [vmem:[#allocation2 + $0x150] sm:$0xff]
    %v285 = vld [vmem:[#allocation2 + $0x158] sm:$0xff]
    %v286 = vld [vmem:[#allocation2 + $0x160] sm:$0xff]
    %v287 = vld [vmem:[#allocation2 + $0x168] sm:$0xff]
    %v288 = vld [vmem:[#allocation2 + $0x170] sm:$0xff]
    %v289 = vld [vmem:[#allocation2 + $0x178] sm:$0xff]
    %v338 = vunpack.c.l.b16 %v194
    %v339 = vunpack.c.l.b16 %v195
    %v340 = vunpack.c.l.b16 %v196
    %v341 = vunpack.c.l.b16 %v197
    %v342 = vunpack.c.l.b16 %v198
    %v343 = vunpack.c.l.b16 %v199
    %v344 = vunpack.c.l.b16 %v200
    %v345 = vunpack.c.l.b16 %v201
    %v346 = vunpack.c.l.b16 %v202
    %v347 = vunpack.c.l.b16 %v203
    %v348 = vunpack.c.l.b16 %v204
    %v349 = vunpack.c.l.b16 %v205
    %v350 = vunpack.c.l.b16 %v206
    %v351 = vunpack.c.l.b16 %v207
    %v352 = vunpack.c.l.b16 %v208
    %v353 = vunpack.c.l.b16 %v209
    %v354 = vunpack.c.l.b16 %v210
    %v355 = vunpack.c.l.b16 %v211
    %v356 = vunpack.c.l.b16 %v212
    %v357 = vunpack.c.l.b16 %v213
    %v358 = vunpack.c.l.b16 %v214
    %v359 = vunpack.c.l.b16 %v215
    %v360 = vunpack.c.l.b16 %v216
    %v361 = vunpack.c.l.b16 %v217
    %v362 = vunpack.c.l.b16 %v218
    %v363 = vunpack.c.l.b16 %v219
    %v364 = vunpack.c.l.b16 %v220
    %v365 = vunpack.c.l.b16 %v221
    %v366 = vunpack.c.l.b16 %v222
    %v367 = vunpack.c.l.b16 %v223
    %v368 = vunpack.c.l.b16 %v224
    %v369 = vunpack.c.l.b16 %v225
    %v370 = vunpack.c.l.b16 %v226
    %v371 = vunpack.c.l.b16 %v227
    %v372 = vunpack.c.l.b16 %v228
    %v373 = vunpack.c.l.b16 %v229
    %v374 = vunpack.c.l.b16 %v230
    %v375 = vunpack.c.l.b16 %v231
    %v376 = vunpack.c.l.b16 %v232
    %v377 = vunpack.c.l.b16 %v233
    %v378 = vunpack.c.l.b16 %v234
    %v379 = vunpack.c.l.b16 %v235
    %v380 = vunpack.c.l.b16 %v236
    %v381 = vunpack.c.l.b16 %v237
    %v382 = vunpack.c.l.b16 %v238
    %v383 = vunpack.c.l.b16 %v239
    %v384 = vunpack.c.l.b16 %v240
    %v385 = vunpack.c.l.b16 %v241
    %v386 = vpack.c.b16 %v339, %v338
    %v387 = vpack.c.b16 %v341, %v340
    %v388 = vpack.c.b16 %v343, %v342
    %v389 = vpack.c.b16 %v345, %v344
    %v390 = vpack.c.b16 %v347, %v346
    %v391 = vpack.c.b16 %v349, %v348
    %v392 = vpack.c.b16 %v351, %v350
    %v393 = vpack.c.b16 %v353, %v352
    %v394 = vpack.c.b16 %v355, %v354
    %v395 = vpack.c.b16 %v357, %v356
    %v396 = vpack.c.b16 %v359, %v358
    %v397 = vpack.c.b16 %v361, %v360
    %v398 = vpack.c.b16 %v363, %v362
    %v399 = vpack.c.b16 %v365, %v364
    %v400 = vpack.c.b16 %v367, %v366
    %v401 = vpack.c.b16 %v369, %v368
    %v402 = vpack.c.b16 %v371, %v370
    %v403 = vpack.c.b16 %v373, %v372
    %v404 = vpack.c.b16 %v375, %v374
    %v405 = vpack.c.b16 %v377, %v376
    %v406 = vpack.c.b16 %v379, %v378
    %v407 = vpack.c.b16 %v381, %v380
    %v408 = vpack.c.b16 %v383, %v382
    %v409 = vpack.c.b16 %v385, %v384
    %434 = vmatprep.subr.bf16.mxu0 0
    %435 = vmatpush1.bf16.msra.mxu0 %v393
    %436 = vmatprep.subr.bf16.mxu0 0
    %437 = vmatpush1.bf16.msra.mxu0 %v392
    %438 = vmatprep.subr.bf16.mxu0 0
    %439 = vmatpush1.bf16.msra.mxu0 %v391
    %440 = vmatprep.subr.bf16.mxu0 0
    %441 = vmatpush1.bf16.msra.mxu0 %v390
    %442 = vmatprep.subr.bf16.mxu0 0
    %443 = vmatpush1.bf16.msra.mxu0 %v389
    %444 = vmatprep.subr.bf16.mxu0 0
    %445 = vmatpush1.bf16.msra.mxu0 %v388
    %446 = vmatprep.subr.bf16.mxu0 0
    %447 = vmatpush1.bf16.msra.mxu0 %v387
    %448 = vmatprep.subr.bf16.mxu0 0
    %449 = vmatpush1.bf16.msra.mxu0 %v386
    %450 = vmatprep.subr.bf16.mxu0 0
    %451 = vmatpush2.bf16.msra.mxu0 %v401
    %452 = vmatprep.subr.bf16.mxu0 0
    %453 = vmatpush2.bf16.msra.mxu0 %v400
    %454 = vmatprep.subr.bf16.mxu0 0
    %455 = vmatpush2.bf16.msra.mxu0 %v399
    %456 = vmatprep.subr.bf16.mxu0 0
    %457 = vmatpush2.bf16.msra.mxu0 %v398
    %458 = vmatprep.subr.bf16.mxu0 0
    %459 = vmatpush2.bf16.msra.mxu0 %v397
    %460 = vmatprep.subr.bf16.mxu0 0
    %461 = vmatpush2.bf16.msra.mxu0 %v396
    %462 = vmatprep.subr.bf16.mxu0 0
    %463 = vmatpush2.bf16.msra.mxu0 %v395
    %464 = vmatprep.subr.bf16.mxu0 0
    %465 = vmatpush2.bf16.msra.mxu0 %v394
    %466 = vmatprep.mubr.bf16.mxu0 %v118
    %467 = vmatmul.mubr.bf16.gmra.mxu0 %v117
    %v468 = vpop.f32.mrf.mxu0
    %v469 = vadd.f32 0.0, %v468
    %v470 = vpop.f32.mrf.mxu0
    %v471 = vpop.f32.mrf.mxu0
    %v472 = vadd.f32 0.0, %v471
    %v473 = vpop.f32.mrf.mxu0
    %474 = vmatprep.mubr.bf16.mxu0 %v121
    %475 = vmatmul.mubr.bf16.gmra.mxu0 %v120
    %v476 = vpop.f32.mrf.mxu0
    %v477 = vadd.f32 0.0, %v476
    %v478 = vpop.f32.mrf.mxu0
    %v479 = vpop.f32.mrf.mxu0
    %v480 = vadd.f32 0.0, %v479
    %v481 = vpop.f32.mrf.mxu0
    %482 = vmatprep.mubr.bf16.mxu0 %v124
    %483 = vmatmul.mubr.bf16.gmra.mxu0 %v123
    %v484 = vpop.f32.mrf.mxu0
    %v485 = vadd.f32 0.0, %v484
    %v486 = vpop.f32.mrf.mxu0
    %v487 = vpop.f32.mrf.mxu0
    %v488 = vadd.f32 0.0, %v487
    %v489 = vpop.f32.mrf.mxu0
    %490 = vmatprep.mubr.bf16.mxu0 %v127
    %491 = vmatmul.mubr.bf16.gmra.mxu0 %v126
    %v492 = vpop.f32.mrf.mxu0
    %v493 = vadd.f32 0.0, %v492
    %v494 = vpop.f32.mrf.mxu0
    %v495 = vpop.f32.mrf.mxu0
    %v496 = vadd.f32 0.0, %v495
    %v497 = vpop.f32.mrf.mxu0
    %498 = vmatprep.mubr.bf16.mxu0 %v130
    %499 = vmatmul.mubr.bf16.gmra.mxu0 %v129
    %v500 = vpop.f32.mrf.mxu0
    %v501 = vadd.f32 0.0, %v500
    %v502 = vpop.f32.mrf.mxu0
    %v503 = vpop.f32.mrf.mxu0
    %v504 = vadd.f32 0.0, %v503
    %v505 = vpop.f32.mrf.mxu0
    %506 = vmatprep.mubr.bf16.mxu0 %v133
    %507 = vmatmul.mubr.bf16.gmra.mxu0 %v132
    %v508 = vpop.f32.mrf.mxu0
    %v509 = vadd.f32 0.0, %v508
    %v510 = vpop.f32.mrf.mxu0
    %v511 = vpop.f32.mrf.mxu0
    %v512 = vadd.f32 0.0, %v511
    %v513 = vpop.f32.mrf.mxu0
    %514 = vmatprep.mubr.bf16.mxu0 %v136
    %515 = vmatmul.mubr.bf16.gmra.mxu0 %v135
    %v516 = vpop.f32.mrf.mxu0
    %v517 = vadd.f32 0.0, %v516
    %v518 = vpop.f32.mrf.mxu0
    %v519 = vpop.f32.mrf.mxu0
    %v520 = vadd.f32 0.0, %v519
    %v521 = vpop.f32.mrf.mxu0
    %522 = vmatprep.mubr.bf16.mxu0 %v139
    %523 = vmatmul.mubr.bf16.gmra.mxu0 %v138
    %v524 = vpop.f32.mrf.mxu0
    %v525 = vadd.f32 0.0, %v524
    %v526 = vpop.f32.mrf.mxu0
    %v527 = vpop.f32.mrf.mxu0
    %v528 = vadd.f32 0.0, %v527
    %v529 = vpop.f32.mrf.mxu0
    %530 = vmatprep.mubr.bf16.mxu0 %v142
    %531 = vmatmul.mubr.bf16.gmra.mxu0 %v141
    %v532 = vpop.f32.mrf.mxu0
    %v533 = vadd.f32 0.0, %v532
    %v534 = vpop.f32.mrf.mxu0
    %v535 = vpop.f32.mrf.mxu0
    %v536 = vadd.f32 0.0, %v535
    %v537 = vpop.f32.mrf.mxu0
    %538 = vmatprep.mubr.bf16.mxu0 %v145
    %539 = vmatmul.mubr.bf16.gmra.mxu0 %v144
    %v540 = vpop.f32.mrf.mxu0
    %v541 = vadd.f32 0.0, %v540
    %v542 = vpop.f32.mrf.mxu0
    %v543 = vpop.f32.mrf.mxu0
    %v544 = vadd.f32 0.0, %v543
    %v545 = vpop.f32.mrf.mxu0
    %546 = vmatprep.mubr.bf16.mxu0 %v148
    %547 = vmatmul.mubr.bf16.gmra.mxu0 %v147
    %v548 = vpop.f32.mrf.mxu0
    %v549 = vadd.f32 0.0, %v548
    %v550 = vpop.f32.mrf.mxu0
    %v551 = vpop.f32.mrf.mxu0
    %v552 = vadd.f32 0.0, %v551
    %v553 = vpop.f32.mrf.mxu0
    %554 = vmatprep.mubr.bf16.mxu0 %v151
    %555 = vmatmul.mubr.bf16.gmra.mxu0 %v150
    %v556 = vpop.f32.mrf.mxu0
    %v557 = vadd.f32 0.0, %v556
    %v558 = vpop.f32.mrf.mxu0
    %v559 = vpop.f32.mrf.mxu0
    %v560 = vadd.f32 0.0, %v559
    %v561 = vpop.f32.mrf.mxu0
    %562 = vmatprep.mubr.bf16.mxu0 %v154
    %563 = vmatmul.mubr.bf16.gmra.mxu0 %v153
    %v564 = vpop.f32.mrf.mxu0
    %v565 = vadd.f32 0.0, %v564
    %v566 = vpop.f32.mrf.mxu0
    %v567 = vpop.f32.mrf.mxu0
    %v568 = vadd.f32 0.0, %v567
    %v569 = vpop.f32.mrf.mxu0
    %570 = vmatprep.mubr.bf16.mxu0 %v157
    %571 = vmatmul.mubr.bf16.gmra.mxu0 %v156
    %v572 = vpop.f32.mrf.mxu0
    %v573 = vadd.f32 0.0, %v572
    %v574 = vpop.f32.mrf.mxu0
    %v575 = vpop.f32.mrf.mxu0
    %v576 = vadd.f32 0.0, %v575
    %v577 = vpop.f32.mrf.mxu0
    %578 = vmatprep.mubr.bf16.mxu0 %v160
    %579 = vmatmul.mubr.bf16.gmra.mxu0 %v159
    %v580 = vpop.f32.mrf.mxu0
    %v581 = vadd.f32 0.0, %v580
    %v582 = vpop.f32.mrf.mxu0
    %v583 = vpop.f32.mrf.mxu0
    %v584 = vadd.f32 0.0, %v583
    %v585 = vpop.f32.mrf.mxu0
    %586 = vmatprep.mubr.bf16.mxu0 %v163
    %587 = vmatmul.mubr.bf16.gmra.mxu0 %v162
    %v588 = vpop.f32.mrf.mxu0
    %v589 = vadd.f32 0.0, %v588
    %v590 = vpop.f32.mrf.mxu0
    %v591 = vpop.f32.mrf.mxu0
    %v592 = vadd.f32 0.0, %v591
    %v593 = vpop.f32.mrf.mxu0
    %594 = vmatprep.mubr.bf16.mxu0 %v166
    %595 = vmatmul.mubr.bf16.gmra.mxu0 %v165
    %v596 = vpop.f32.mrf.mxu0
    %v597 = vadd.f32 0.0, %v596
    %v598 = vpop.f32.mrf.mxu0
    %v599 = vpop.f32.mrf.mxu0
    %v600 = vadd.f32 0.0, %v599
    %v601 = vpop.f32.mrf.mxu0
    %602 = vmatprep.mubr.bf16.mxu0 %v169
    %603 = vmatmul.mubr.bf16.gmra.mxu0 %v168
    %v604 = vpop.f32.mrf.mxu0
    %v605 = vadd.f32 0.0, %v604
    %v606 = vpop.f32.mrf.mxu0
    %v607 = vpop.f32.mrf.mxu0
    %v608 = vadd.f32 0.0, %v607
    %v609 = vpop.f32.mrf.mxu0
    %610 = vmatprep.mubr.bf16.mxu0 %v172
    %611 = vmatmul.mubr.bf16.gmra.mxu0 %v171
    %v612 = vpop.f32.mrf.mxu0
    %v613 = vadd.f32 0.0, %v612
    %v614 = vpop.f32.mrf.mxu0
    %v615 = vpop.f32.mrf.mxu0
    %v616 = vadd.f32 0.0, %v615
    %v617 = vpop.f32.mrf.mxu0
    %618 = vmatprep.mubr.bf16.mxu0 %v175
    %619 = vmatmul.mubr.bf16.gmra.mxu0 %v174
    %v620 = vpop.f32.mrf.mxu0
    %v621 = vadd.f32 0.0, %v620
    %v622 = vpop.f32.mrf.mxu0
    %v623 = vpop.f32.mrf.mxu0
    %v624 = vadd.f32 0.0, %v623
    %v625 = vpop.f32.mrf.mxu0
    %626 = vmatprep.mubr.bf16.mxu0 %v178
    %627 = vmatmul.mubr.bf16.gmra.mxu0 %v177
    %v628 = vpop.f32.mrf.mxu0
    %v629 = vadd.f32 0.0, %v628
    %v630 = vpop.f32.mrf.mxu0
    %v631 = vpop.f32.mrf.mxu0
    %v632 = vadd.f32 0.0, %v631
    %v633 = vpop.f32.mrf.mxu0
    %634 = vmatprep.mubr.bf16.mxu0 %v181
    %635 = vmatmul.mubr.bf16.gmra.mxu0 %v180
    %v636 = vpop.f32.mrf.mxu0
    %v637 = vadd.f32 0.0, %v636
    %v638 = vpop.f32.mrf.mxu0
    %v639 = vpop.f32.mrf.mxu0
    %v640 = vadd.f32 0.0, %v639
    %v641 = vpop.f32.mrf.mxu0
    %642 = vmatprep.mubr.bf16.mxu0 %v184
    %643 = vmatmul.mubr.bf16.gmra.mxu0 %v183
    %v644 = vpop.f32.mrf.mxu0
    %v645 = vadd.f32 0.0, %v644
    %v646 = vpop.f32.mrf.mxu0
    %v647 = vpop.f32.mrf.mxu0
    %v648 = vadd.f32 0.0, %v647
    %v649 = vpop.f32.mrf.mxu0
    %650 = vmatprep.mubr.bf16.mxu0 %v187
    %651 = vmatmul.mubr.bf16.gmra.mxu0 %v186
    %v652 = vpop.f32.mrf.mxu0
    %v653 = vadd.f32 0.0, %v652
    %v654 = vpop.f32.mrf.mxu0
    %v655 = vpop.f32.mrf.mxu0
    %v656 = vadd.f32 0.0, %v655
    %v657 = vpop.f32.mrf.mxu0
    %658 = vdwg.mxu0
    %659 = vmatprep.subr.bf16.mxu0 0
    %660 = vmatpush1.bf16.msra.mxu0 %v409
    %661 = vmatprep.subr.bf16.mxu0 0
    %662 = vmatpush1.bf16.msra.mxu0 %v408
    %663 = vmatprep.subr.bf16.mxu0 0
    %664 = vmatpush1.bf16.msra.mxu0 %v407
    %665 = vmatprep.subr.bf16.mxu0 0
    %666 = vmatpush1.bf16.msra.mxu0 %v406
    %667 = vmatprep.subr.bf16.mxu0 0
    %668 = vmatpush1.bf16.msra.mxu0 %v405
    %669 = vmatprep.subr.bf16.mxu0 0
    %670 = vmatpush1.bf16.msra.mxu0 %v404
    %671 = vmatprep.subr.bf16.mxu0 0
    %672 = vmatpush1.bf16.msra.mxu0 %v403
    %673 = vmatprep.subr.bf16.mxu0 0
    %674 = vmatpush1.bf16.msra.mxu0 %v402
    %675 = vmatprep.subr.bf16.mxu0 0
    %676 = vmatpush2.bf16.msra.mxu0 0
    %677 = vmatprep.subr.bf16.mxu0 0
    %678 = vmatpush2.bf16.msra.mxu0 0
    %679 = vmatprep.subr.bf16.mxu0 0
    %680 = vmatpush2.bf16.msra.mxu0 0
    %681 = vmatprep.subr.bf16.mxu0 0
    %682 = vmatpush2.bf16.msra.mxu0 0
    %683 = vmatprep.subr.bf16.mxu0 0
    %684 = vmatpush2.bf16.msra.mxu0 0
    %685 = vmatprep.subr.bf16.mxu0 0
    %686 = vmatpush2.bf16.msra.mxu0 0
    %687 = vmatprep.subr.bf16.mxu0 0
    %688 = vmatpush2.bf16.msra.mxu0 0
    %689 = vmatprep.subr.bf16.mxu0 0
    %690 = vmatpush2.bf16.msra.mxu0 0
    %691 = vmatprep.mubr.bf16.mxu0 0
    %692 = vmatmul.mubr.bf16.gmra.mxu0 %v119
    %v693 = vpop.f32.mrf.mxu0
    %v694 = vadd.f32 %v469, %v693
    %v695 = vpop.f32.mrf.mxu0
    %v696 = vpop.f32.mrf.mxu0
    %v697 = vadd.f32 %v472, %v696
    %v698 = vpop.f32.mrf.mxu0
    %699 = vmatprep.mubr.bf16.mxu0 0
    %700 = vmatmul.mubr.bf16.gmra.mxu0 %v122
    %v701 = vpop.f32.mrf.mxu0
    %v702 = vadd.f32 %v477, %v701
    %v703 = vpop.f32.mrf.mxu0
    %v704 = vpop.f32.mrf.mxu0
    %v705 = vadd.f32 %v480, %v704
    %v706 = vpop.f32.mrf.mxu0
    %707 = vmatprep.mubr.bf16.mxu0 0
    %708 = vmatmul.mubr.bf16.gmra.mxu0 %v125
    %v709 = vpop.f32.mrf.mxu0
    %v710 = vadd.f32 %v485, %v709
    %v711 = vpop.f32.mrf.mxu0
    %v712 = vpop.f32.mrf.mxu0
    %v713 = vadd.f32 %v488, %v712
    %v714 = vpop.f32.mrf.mxu0
    %715 = vmatprep.mubr.bf16.mxu0 0
    %716 = vmatmul.mubr.bf16.gmra.mxu0 %v128
    %v717 = vpop.f32.mrf.mxu0
    %v718 = vadd.f32 %v493, %v717
    %v719 = vpop.f32.mrf.mxu0
    %v720 = vpop.f32.mrf.mxu0
    %v721 = vadd.f32 %v496, %v720
    %v722 = vpop.f32.mrf.mxu0
    %723 = vmatprep.mubr.bf16.mxu0 0
    %724 = vmatmul.mubr.bf16.gmra.mxu0 %v131
    %v725 = vpop.f32.mrf.mxu0
    %v726 = vadd.f32 %v501, %v725
    %v727 = vpop.f32.mrf.mxu0
    %v728 = vpop.f32.mrf.mxu0
    %v729 = vadd.f32 %v504, %v728
    %v730 = vpop.f32.mrf.mxu0
    %731 = vmatprep.mubr.bf16.mxu0 0
    %732 = vmatmul.mubr.bf16.gmra.mxu0 %v134
    %v733 = vpop.f32.mrf.mxu0
    %v734 = vadd.f32 %v509, %v733
    %v735 = vpop.f32.mrf.mxu0
    %v736 = vpop.f32.mrf.mxu0
    %v737 = vadd.f32 %v512, %v736
    %v738 = vpop.f32.mrf.mxu0
    %739 = vmatprep.mubr.bf16.mxu0 0
    %740 = vmatmul.mubr.bf16.gmra.mxu0 %v137
    %v741 = vpop.f32.mrf.mxu0
    %v742 = vadd.f32 %v517, %v741
    %v743 = vpop.f32.mrf.mxu0
    %v744 = vpop.f32.mrf.mxu0
    %v745 = vadd.f32 %v520, %v744
    %v746 = vpop.f32.mrf.mxu0
    %747 = vmatprep.mubr.bf16.mxu0 0
    %748 = vmatmul.mubr.bf16.gmra.mxu0 %v140
    %v749 = vpop.f32.mrf.mxu0
    %v750 = vadd.f32 %v525, %v749
    %v751 = vpop.f32.mrf.mxu0
    %v752 = vpop.f32.mrf.mxu0
    %v753 = vadd.f32 %v528, %v752
    %v754 = vpop.f32.mrf.mxu0
    %755 = vmatprep.mubr.bf16.mxu0 0
    %756 = vmatmul.mubr.bf16.gmra.mxu0 %v143
    %v757 = vpop.f32.mrf.mxu0
    %v758 = vadd.f32 %v533, %v757
    %v759 = vpop.f32.mrf.mxu0
    %v760 = vpop.f32.mrf.mxu0
    %v761 = vadd.f32 %v536, %v760
    %v762 = vpop.f32.mrf.mxu0
    %763 = vmatprep.mubr.bf16.mxu0 0
    %764 = vmatmul.mubr.bf16.gmra.mxu0 %v146
    %v765 = vpop.f32.mrf.mxu0
    %v766 = vadd.f32 %v541, %v765
    %v767 = vpop.f32.mrf.mxu0
    %v768 = vpop.f32.mrf.mxu0
    %v769 = vadd.f32 %v544, %v768
    %v770 = vpop.f32.mrf.mxu0
    %771 = vmatprep.mubr.bf16.mxu0 0
    %772 = vmatmul.mubr.bf16.gmra.mxu0 %v149
    %v773 = vpop.f32.mrf.mxu0
    %v774 = vadd.f32 %v549, %v773
    %v775 = vpop.f32.mrf.mxu0
    %v776 = vpop.f32.mrf.mxu0
    %v777 = vadd.f32 %v552, %v776
    %v778 = vpop.f32.mrf.mxu0
    %779 = vmatprep.mubr.bf16.mxu0 0
    %780 = vmatmul.mubr.bf16.gmra.mxu0 %v152
    %v781 = vpop.f32.mrf.mxu0
    %v782 = vadd.f32 %v557, %v781
    %v783 = vpop.f32.mrf.mxu0
    %v784 = vpop.f32.mrf.mxu0
    %v785 = vadd.f32 %v560, %v784
    %v786 = vpop.f32.mrf.mxu0
    %787 = vmatprep.mubr.bf16.mxu0 0
    %788 = vmatmul.mubr.bf16.gmra.mxu0 %v155
    %v789 = vpop.f32.mrf.mxu0
    %v790 = vadd.f32 %v565, %v789
    %v791 = vpop.f32.mrf.mxu0
    %v792 = vpop.f32.mrf.mxu0
    %v793 = vadd.f32 %v568, %v792
    %v794 = vpop.f32.mrf.mxu0
    %795 = vmatprep.mubr.bf16.mxu0 0
    %796 = vmatmul.mubr.bf16.gmra.mxu0 %v158
    %v797 = vpop.f32.mrf.mxu0
    %v798 = vadd.f32 %v573, %v797
    %v799 = vpop.f32.mrf.mxu0
    %v800 = vpop.f32.mrf.mxu0
    %v801 = vadd.f32 %v576, %v800
    %v802 = vpop.f32.mrf.mxu0
    %803 = vmatprep.mubr.bf16.mxu0 0
    %804 = vmatmul.mubr.bf16.gmra.mxu0 %v161
    %v805 = vpop.f32.mrf.mxu0
    %v806 = vadd.f32 %v581, %v805
    %v807 = vpop.f32.mrf.mxu0
    %v808 = vpop.f32.mrf.mxu0
    %v809 = vadd.f32 %v584, %v808
    %v810 = vpop.f32.mrf.mxu0
    %811 = vmatprep.mubr.bf16.mxu0 0
    %812 = vmatmul.mubr.bf16.gmra.mxu0 %v164
    %v813 = vpop.f32.mrf.mxu0
    %v814 = vadd.f32 %v589, %v813
    %v815 = vpop.f32.mrf.mxu0
    %v816 = vpop.f32.mrf.mxu0
    %v817 = vadd.f32 %v592, %v816
    %v818 = vpop.f32.mrf.mxu0
    %819 = vmatprep.mubr.bf16.mxu0 0
    %820 = vmatmul.mubr.bf16.gmra.mxu0 %v167
    %v821 = vpop.f32.mrf.mxu0
    %v822 = vadd.f32 %v597, %v821
    %v823 = vpop.f32.mrf.mxu0
    %v824 = vpop.f32.mrf.mxu0
    %v825 = vadd.f32 %v600, %v824
    %v826 = vpop.f32.mrf.mxu0
    %827 = vmatprep.mubr.bf16.mxu0 0
    %828 = vmatmul.mubr.bf16.gmra.mxu0 %v170
    %v829 = vpop.f32.mrf.mxu0
    %v830 = vadd.f32 %v605, %v829
    %v831 = vpop.f32.mrf.mxu0
    %v832 = vpop.f32.mrf.mxu0
    %v833 = vadd.f32 %v608, %v832
    %v834 = vpop.f32.mrf.mxu0
    %835 = vmatprep.mubr.bf16.mxu0 0
    %836 = vmatmul.mubr.bf16.gmra.mxu0 %v173
    %v837 = vpop.f32.mrf.mxu0
    %v838 = vadd.f32 %v613, %v837
    %v839 = vpop.f32.mrf.mxu0
    %v840 = vpop.f32.mrf.mxu0
    %v841 = vadd.f32 %v616, %v840
    %v842 = vpop.f32.mrf.mxu0
    %843 = vmatprep.mubr.bf16.mxu0 0
    %844 = vmatmul.mubr.bf16.gmra.mxu0 %v176
    %v845 = vpop.f32.mrf.mxu0
    %v846 = vadd.f32 %v621, %v845
    %v847 = vpop.f32.mrf.mxu0
    %v848 = vpop.f32.mrf.mxu0
    %v849 = vadd.f32 %v624, %v848
    %v850 = vpop.f32.mrf.mxu0
    %851 = vmatprep.mubr.bf16.mxu0 0
    %852 = vmatmul.mubr.bf16.gmra.mxu0 %v179
    %v853 = vpop.f32.mrf.mxu0
    %v854 = vadd.f32 %v629, %v853
    %v855 = vpop.f32.mrf.mxu0
    %v856 = vpop.f32.mrf.mxu0
    %v857 = vadd.f32 %v632, %v856
    %v858 = vpop.f32.mrf.mxu0
    %859 = vmatprep.mubr.bf16.mxu0 0
    %860 = vmatmul.mubr.bf16.gmra.mxu0 %v182
    %v861 = vpop.f32.mrf.mxu0
    %v862 = vadd.f32 %v637, %v861
    %v863 = vpop.f32.mrf.mxu0
    %v864 = vpop.f32.mrf.mxu0
    %v865 = vadd.f32 %v640, %v864
    %v866 = vpop.f32.mrf.mxu0
    %867 = vmatprep.mubr.bf16.mxu0 0
    %868 = vmatmul.mubr.bf16.gmra.mxu0 %v185
    %v869 = vpop.f32.mrf.mxu0
    %v870 = vadd.f32 %v645, %v869
    %v871 = vpop.f32.mrf.mxu0
    %v872 = vpop.f32.mrf.mxu0
    %v873 = vadd.f32 %v648, %v872
    %v874 = vpop.f32.mrf.mxu0
    %875 = vmatprep.mubr.bf16.mxu0 0
    %876 = vmatmul.mubr.bf16.gmra.mxu0 %v188
    %v877 = vpop.f32.mrf.mxu0
    %v878 = vadd.f32 %v653, %v877
    %v879 = vpop.f32.mrf.mxu0
    %v880 = vpop.f32.mrf.mxu0
    %v881 = vadd.f32 %v656, %v880
    %v882 = vpop.f32.mrf.mxu0
    %883 = vdwg.mxu0
    %v884 = vadd.f32 %v242, %v694
    %v885 = vadd.f32 %v243, %v697
    %v886 = vadd.f32 %v244, %v702
    %v887 = vadd.f32 %v245, %v705
    %v888 = vadd.f32 %v246, %v710
    %v889 = vadd.f32 %v247, %v713
    %v890 = vadd.f32 %v248, %v718
    %v891 = vadd.f32 %v249, %v721
    %v892 = vadd.f32 %v250, %v726
    %v893 = vadd.f32 %v251, %v729
    %v894 = vadd.f32 %v252, %v734
    %v895 = vadd.f32 %v253, %v737
    %v896 = vadd.f32 %v254, %v742
    %v897 = vadd.f32 %v255, %v745
    %v898 = vadd.f32 %v256, %v750
    %v899 = vadd.f32 %v257, %v753
    %v900 = vadd.f32 %v258, %v758
    %v901 = vadd.f32 %v259, %v761
    %v902 = vadd.f32 %v260, %v766
    %v903 = vadd.f32 %v261, %v769
    %v904 = vadd.f32 %v262, %v774
    %v905 = vadd.f32 %v263, %v777
    %v906 = vadd.f32 %v264, %v782
    %v907 = vadd.f32 %v265, %v785
    %v908 = vadd.f32 %v266, %v790
    %v909 = vadd.f32 %v267, %v793
    %v910 = vadd.f32 %v268, %v798
    %v911 = vadd.f32 %v269, %v801
    %v912 = vadd.f32 %v270, %v806
    %v913 = vadd.f32 %v271, %v809
    %v914 = vadd.f32 %v272, %v814
    %v915 = vadd.f32 %v273, %v817
    %v916 = vadd.f32 %v274, %v822
    %v917 = vadd.f32 %v275, %v825
    %v918 = vadd.f32 %v276, %v830
    %v919 = vadd.f32 %v277, %v833
    %v920 = vadd.f32 %v278, %v838
    %v921 = vadd.f32 %v279, %v841
    %v922 = vadd.f32 %v280, %v846
    %v923 = vadd.f32 %v281, %v849
    %v924 = vadd.f32 %v282, %v854
    %v925 = vadd.f32 %v283, %v857
    %v926 = vadd.f32 %v284, %v862
    %v927 = vadd.f32 %v285, %v865
    %v928 = vadd.f32 %v286, %v870
    %v929 = vadd.f32 %v287, %v873
    %v930 = vadd.f32 %v288, %v878
    %v931 = vadd.f32 %v289, %v881
    %vm932 = vcmask 130048
    %933 = vst.msk [vmem:[#allocation2] sm:$0xff] %vm932, %v884
    %934 = vst.msk [vmem:[#allocation2 + $0x8] sm:$0xff] %vm932, %v885
    %935 = vst.msk [vmem:[#allocation2 + $0x10] sm:$0xff] %vm932, %v886
    %936 = vst.msk [vmem:[#allocation2 + $0x18] sm:$0xff] %vm932, %v887
    %937 = vst.msk [vmem:[#allocation2 + $0x20] sm:$0xff] %vm932, %v888
    %938 = vst.msk [vmem:[#allocation2 + $0x28] sm:$0xff] %vm932, %v889
    %939 = vst.msk [vmem:[#allocation2 + $0x30] sm:$0xff] %vm932, %v890
    %940 = vst.msk [vmem:[#allocation2 + $0x38] sm:$0xff] %vm932, %v891
    %941 = vst.msk [vmem:[#allocation2 + $0x40] sm:$0xff] %vm932, %v892
    %942 = vst.msk [vmem:[#allocation2 + $0x48] sm:$0xff] %vm932, %v893
    %943 = vst.msk [vmem:[#allocation2 + $0x50] sm:$0xff] %vm932, %v894
    %944 = vst.msk [vmem:[#allocation2 + $0x58] sm:$0xff] %vm932, %v895
    %945 = vst.msk [vmem:[#allocation2 + $0x60] sm:$0xff] %vm932, %v896
    %946 = vst.msk [vmem:[#allocation2 + $0x68] sm:$0xff] %vm932, %v897
    %947 = vst.msk [vmem:[#allocation2 + $0x70] sm:$0xff] %vm932, %v898
    %948 = vst.msk [vmem:[#allocation2 + $0x78] sm:$0xff] %vm932, %v899
    %949 = vst.msk [vmem:[#allocation2 + $0x80] sm:$0xff] %vm932, %v900
    %950 = vst.msk [vmem:[#allocation2 + $0x88] sm:$0xff] %vm932, %v901
    %951 = vst.msk [vmem:[#allocation2 + $0x90] sm:$0xff] %vm932, %v902
    %952 = vst.msk [vmem:[#allocation2 + $0x98] sm:$0xff] %vm932, %v903
    %953 = vst.msk [vmem:[#allocation2 + $0xa0] sm:$0xff] %vm932, %v904
    %954 = vst.msk [vmem:[#allocation2 + $0xa8] sm:$0xff] %vm932, %v905
    %955 = vst.msk [vmem:[#allocation2 + $0xb0] sm:$0xff] %vm932, %v906
    %956 = vst.msk [vmem:[#allocation2 + $0xb8] sm:$0xff] %vm932, %v907
    %957 = vst.msk [vmem:[#allocation2 + $0xc0] sm:$0xff] %vm932, %v908
    %958 = vst.msk [vmem:[#allocation2 + $0xc8] sm:$0xff] %vm932, %v909
    %959 = vst.msk [vmem:[#allocation2 + $0xd0] sm:$0xff] %vm932, %v910
    %960 = vst.msk [vmem:[#allocation2 + $0xd8] sm:$0xff] %vm932, %v911
    %961 = vst.msk [vmem:[#allocation2 + $0xe0] sm:$0xff] %vm932, %v912
    %962 = vst.msk [vmem:[#allocation2 + $0xe8] sm:$0xff] %vm932, %v913
    %963 = vst.msk [vmem:[#allocation2 + $0xf0] sm:$0xff] %vm932, %v914
    %964 = vst.msk [vmem:[#allocation2 + $0xf8] sm:$0xff] %vm932, %v915
    %965 = vst.msk [vmem:[#allocation2 + $0x100] sm:$0xff] %vm932, %v916
    %966 = vst.msk [vmem:[#allocation2 + $0x108] sm:$0xff] %vm932, %v917
    %967 = vst.msk [vmem:[#allocation2 + $0x110] sm:$0xff] %vm932, %v918
    %968 = vst.msk [vmem:[#allocation2 + $0x118] sm:$0xff] %vm932, %v919
    %969 = vst.msk [vmem:[#allocation2 + $0x120] sm:$0xff] %vm932, %v920
    %970 = vst.msk [vmem:[#allocation2 + $0x128] sm:$0xff] %vm932, %v921
    %971 = vst.msk [vmem:[#allocation2 + $0x130] sm:$0xff] %vm932, %v922
    %972 = vst.msk [vmem:[#allocation2 + $0x138] sm:$0xff] %vm932, %v923
    %973 = vst.msk [vmem:[#allocation2 + $0x140] sm:$0xff] %vm932, %v924
    %974 = vst.msk [vmem:[#allocation2 + $0x148] sm:$0xff] %vm932, %v925
    %975 = vst.msk [vmem:[#allocation2 + $0x150] sm:$0xff] %vm932, %v926
    %976 = vst.msk [vmem:[#allocation2 + $0x158] sm:$0xff] %vm932, %v927
    %977 = vst.msk [vmem:[#allocation2 + $0x160] sm:$0xff] %vm932, %v928
    %978 = vst.msk [vmem:[#allocation2 + $0x168] sm:$0xff] %vm932, %v929
    %979 = vst.msk [vmem:[#allocation2 + $0x170] sm:$0xff] %vm932, %v930
    %980 = vst.msk [vmem:[#allocation2 + $0x178] sm:$0xff] %vm932, %v931
    // Predicated region
    $region34: #{tpu_custom_call.1} parent=1 // pred_check
      %p981 = pneg %p28
    $region35: #{tpu_custom_call.1} parent=1 // pred_check_branch
      %983 = sbr.rel (%p981) target = $region37
    $region36: #{tpu_custom_call.1} parent=1 // pred_region
      %v984 = vld [vmem:[#allocation2] sm:$0xff]
      %v985 = vld [vmem:[#allocation2 + $0x8] sm:$0xff]
      %v986 = vld [vmem:[#allocation2 + $0x10] sm:$0xff]
      %v987 = vld [vmem:[#allocation2 + $0x18] sm:$0xff]
      %v988 = vld [vmem:[#allocation2 + $0x20] sm:$0xff]
      %v989 = vld [vmem:[#allocation2 + $0x28] sm:$0xff]
      %v990 = vld [vmem:[#allocation2 + $0x30] sm:$0xff]
      %v991 = vld [vmem:[#allocation2 + $0x38] sm:$0xff]
      %v992 = vld [vmem:[#allocation2 + $0x40] sm:$0xff]
      %v993 = vld [vmem:[#allocation2 + $0x48] sm:$0xff]
      %v994 = vld [vmem:[#allocation2 + $0x50] sm:$0xff]
      %v995 = vld [vmem:[#allocation2 + $0x58] sm:$0xff]
      %v996 = vld [vmem:[#allocation2 + $0x60] sm:$0xff]
      %v997 = vld [vmem:[#allocation2 + $0x68] sm:$0xff]
      %v998 = vld [vmem:[#allocation2 + $0x70] sm:$0xff]
      %v999 = vld [vmem:[#allocation2 + $0x78] sm:$0xff]
      %v1000 = vld [vmem:[#allocation2 + $0x80] sm:$0xff]
      %v1001 = vld [vmem:[#allocation2 + $0x88] sm:$0xff]
      %v1002 = vld [vmem:[#allocation2 + $0x90] sm:$0xff]
      %v1003 = vld [vmem:[#allocation2 + $0x98] sm:$0xff]
      %v1004 = vld [vmem:[#allocation2 + $0xa0] sm:$0xff]
      %v1005 = vld [vmem:[#allocation2 + $0xa8] sm:$0xff]
      %v1006 = vld [vmem:[#allocation2 + $0xb0] sm:$0xff]
      %v1007 = vld [vmem:[#allocation2 + $0xb8] sm:$0xff]
      %v1008 = vld [vmem:[#allocation2 + $0xc0] sm:$0xff]
      %v1009 = vld [vmem:[#allocation2 + $0xc8] sm:$0xff]
      %v1010 = vld [vmem:[#allocation2 + $0xd0] sm:$0xff]
      %v1011 = vld [vmem:[#allocation2 + $0xd8] sm:$0xff]
      %v1012 = vld [vmem:[#allocation2 + $0xe0] sm:$0xff]
      %v1013 = vld [vmem:[#allocation2 + $0xe8] sm:$0xff]
      %v1014 = vld [vmem:[#allocation2 + $0xf0] sm:$0xff]
      %v1015 = vld [vmem:[#allocation2 + $0xf8] sm:$0xff]
      %v1016 = vld [vmem:[#allocation2 + $0x100] sm:$0xff]
      %v1017 = vld [vmem:[#allocation2 + $0x108] sm:$0xff]
      %v1018 = vld [vmem:[#allocation2 + $0x110] sm:$0xff]
      %v1019 = vld [vmem:[#allocation2 + $0x118] sm:$0xff]
      %v1020 = vld [vmem:[#allocation2 + $0x120] sm:$0xff]
      %v1021 = vld [vmem:[#allocation2 + $0x128] sm:$0xff]
      %v1022 = vld [vmem:[#allocation2 + $0x130] sm:$0xff]
      %v1023 = vld [vmem:[#allocation2 + $0x138] sm:$0xff]
      %v1024 = vld [vmem:[#allocation2 + $0x140] sm:$0xff]
      %v1025 = vld [vmem:[#allocation2 + $0x148] sm:$0xff]
      %v1026 = vld [vmem:[#allocation2 + $0x150] sm:$0xff]
      %v1027 = vld [vmem:[#allocation2 + $0x158] sm:$0xff]
      %v1028 = vld [vmem:[#allocation2 + $0x160] sm:$0xff]
      %v1029 = vld [vmem:[#allocation2 + $0x168] sm:$0xff]
      %v1030 = vld [vmem:[#allocation2 + $0x170] sm:$0xff]
      %v1031 = vld [vmem:[#allocation2 + $0x178] sm:$0xff]
      %v1032 = vld [vmem:[%s3] sm:$0xff]
      %v1033 = vld [vmem:[%s3 + $0x8] sm:$0xff]
      %v1034 = vld [vmem:[%s3 + $0x10] sm:$0xff]
      %v1035 = vld [vmem:[%s3 + $0x18] sm:$0xff]
      %v1036 = vld [vmem:[%s3 + $0x20] sm:$0xff]
      %v1037 = vld [vmem:[%s3 + $0x28] sm:$0xff]
      %v1038 = vld [vmem:[%s3 + $0x30] sm:$0xff]
      %v1039 = vld [vmem:[%s3 + $0x38] sm:$0xff]
      %v1040 = vld [vmem:[%s3 + $0x40] sm:$0xff]
      %v1041 = vld [vmem:[%s3 + $0x48] sm:$0xff]
      %v1042 = vld [vmem:[%s3 + $0x50] sm:$0xff]
      %v1043 = vld [vmem:[%s3 + $0x58] sm:$0xff]
      %v1044 = vld [vmem:[%s3 + $0x60] sm:$0xff]
      %v1045 = vld [vmem:[%s3 + $0x68] sm:$0xff]
      %v1046 = vld [vmem:[%s3 + $0x70] sm:$0xff]
      %v1047 = vld [vmem:[%s3 + $0x78] sm:$0xff]
      %v1048 = vld [vmem:[%s3 + $0x80] sm:$0xff]
      %v1049 = vld [vmem:[%s3 + $0x88] sm:$0xff]
      %v1050 = vld [vmem:[%s3 + $0x90] sm:$0xff]
      %v1051 = vld [vmem:[%s3 + $0x98] sm:$0xff]
      %v1052 = vld [vmem:[%s3 + $0xa0] sm:$0xff]
      %v1053 = vld [vmem:[%s3 + $0xa8] sm:$0xff]
      %v1054 = vld [vmem:[%s3 + $0xb0] sm:$0xff]
      %v1055 = vld [vmem:[%s3 + $0xb8] sm:$0xff]
      %v1056 = vld [vmem:[%s3 + $0xc0] sm:$0xff]
      %v1057 = vld [vmem:[%s3 + $0xc8] sm:$0xff]
      %v1058 = vld [vmem:[%s3 + $0xd0] sm:$0xff]
      %v1059 = vld [vmem:[%s3 + $0xd8] sm:$0xff]
      %v1060 = vld [vmem:[%s3 + $0xe0] sm:$0xff]
      %v1061 = vld [vmem:[%s3 + $0xe8] sm:$0xff]
      %v1062 = vld [vmem:[%s3 + $0xf0] sm:$0xff]
      %v1063 = vld [vmem:[%s3 + $0xf8] sm:$0xff]
      %v1064 = vld [vmem:[%s3 + $0x100] sm:$0xff]
      %v1065 = vld [vmem:[%s3 + $0x108] sm:$0xff]
      %v1066 = vld [vmem:[%s3 + $0x110] sm:$0xff]
      %v1067 = vld [vmem:[%s3 + $0x118] sm:$0xff]
      %v1068 = vld [vmem:[%s3 + $0x120] sm:$0xff]
      %v1069 = vld [vmem:[%s3 + $0x128] sm:$0xff]
      %v1070 = vld [vmem:[%s3 + $0x130] sm:$0xff]
      %v1071 = vld [vmem:[%s3 + $0x138] sm:$0xff]
      %v1072 = vld [vmem:[%s3 + $0x140] sm:$0xff]
      %v1073 = vld [vmem:[%s3 + $0x148] sm:$0xff]
      %v1074 = vld [vmem:[%s3 + $0x150] sm:$0xff]
      %v1075 = vld [vmem:[%s3 + $0x158] sm:$0xff]
      %v1076 = vld [vmem:[%s3 + $0x160] sm:$0xff]
      %v1077 = vld [vmem:[%s3 + $0x168] sm:$0xff]
      %v1078 = vld [vmem:[%s3 + $0x170] sm:$0xff]
      %v1079 = vld [vmem:[%s3 + $0x178] sm:$0xff]
      %1081 = vset.pattern.permute.xlu0 0
      %1082 = vperm.xlu0 %1081, %v1032
      %v1083 = vpop.permute.xlu0 %1082
      %1086 = vset.pattern.permute.xlu0 0
      %1087 = vperm.xlu0 %1086, %v1033
      %v1088 = vpop.permute.xlu0 %1087
      %1091 = vset.pattern.permute.xlu0 0
      %1092 = vperm.xlu0 %1091, %v1034
      %v1093 = vpop.permute.xlu0 %1092
      %1096 = vset.pattern.permute.xlu0 0
      %1097 = vperm.xlu0 %1096, %v1035
      %v1098 = vpop.permute.xlu0 %1097
      %1101 = vset.pattern.permute.xlu0 0
      %1102 = vperm.xlu0 %1101, %v1036
      %v1103 = vpop.permute.xlu0 %1102
      %1106 = vset.pattern.permute.xlu0 0
      %1107 = vperm.xlu0 %1106, %v1037
      %v1108 = vpop.permute.xlu0 %1107
      %1111 = vset.pattern.permute.xlu0 0
      %1112 = vperm.xlu0 %1111, %v1038
      %v1113 = vpop.permute.xlu0 %1112
      %1116 = vset.pattern.permute.xlu0 0
      %1117 = vperm.xlu0 %1116, %v1039
      %v1118 = vpop.permute.xlu0 %1117
      %1121 = vset.pattern.permute.xlu0 0
      %1122 = vperm.xlu0 %1121, %v1040
      %v1123 = vpop.permute.xlu0 %1122
      %1126 = vset.pattern.permute.xlu0 0
      %1127 = vperm.xlu0 %1126, %v1041
      %v1128 = vpop.permute.xlu0 %1127
      %1131 = vset.pattern.permute.xlu0 0
      %1132 = vperm.xlu0 %1131, %v1042
      %v1133 = vpop.permute.xlu0 %1132
      %1136 = vset.pattern.permute.xlu0 0
      %1137 = vperm.xlu0 %1136, %v1043
      %v1138 = vpop.permute.xlu0 %1137
      %1141 = vset.pattern.permute.xlu0 0
      %1142 = vperm.xlu0 %1141, %v1044
      %v1143 = vpop.permute.xlu0 %1142
      %1146 = vset.pattern.permute.xlu0 0
      %1147 = vperm.xlu0 %1146, %v1045
      %v1148 = vpop.permute.xlu0 %1147
      %1151 = vset.pattern.permute.xlu0 0
      %1152 = vperm.xlu0 %1151, %v1046
      %v1153 = vpop.permute.xlu0 %1152
      %1156 = vset.pattern.permute.xlu0 0
      %1157 = vperm.xlu0 %1156, %v1047
      %v1158 = vpop.permute.xlu0 %1157
      %1161 = vset.pattern.permute.xlu0 0
      %1162 = vperm.xlu0 %1161, %v1048
      %v1163 = vpop.permute.xlu0 %1162
      %1166 = vset.pattern.permute.xlu0 0
      %1167 = vperm.xlu0 %1166, %v1049
      %v1168 = vpop.permute.xlu0 %1167
      %1171 = vset.pattern.permute.xlu0 0
      %1172 = vperm.xlu0 %1171, %v1050
      %v1173 = vpop.permute.xlu0 %1172
      %1176 = vset.pattern.permute.xlu0 0
      %1177 = vperm.xlu0 %1176, %v1051
      %v1178 = vpop.permute.xlu0 %1177
      %1181 = vset.pattern.permute.xlu0 0
      %1182 = vperm.xlu0 %1181, %v1052
      %v1183 = vpop.permute.xlu0 %1182
      %1186 = vset.pattern.permute.xlu0 0
      %1187 = vperm.xlu0 %1186, %v1053
      %v1188 = vpop.permute.xlu0 %1187
      %1191 = vset.pattern.permute.xlu0 0
      %1192 = vperm.xlu0 %1191, %v1054
      %v1193 = vpop.permute.xlu0 %1192
      %1196 = vset.pattern.permute.xlu0 0
      %1197 = vperm.xlu0 %1196, %v1055
      %v1198 = vpop.permute.xlu0 %1197
      %1201 = vset.pattern.permute.xlu0 0
      %1202 = vperm.xlu0 %1201, %v1056
      %v1203 = vpop.permute.xlu0 %1202
      %1206 = vset.pattern.permute.xlu0 0
      %1207 = vperm.xlu0 %1206, %v1057
      %v1208 = vpop.permute.xlu0 %1207
      %1211 = vset.pattern.permute.xlu0 0
      %1212 = vperm.xlu0 %1211, %v1058
      %v1213 = vpop.permute.xlu0 %1212
      %1216 = vset.pattern.permute.xlu0 0
      %1217 = vperm.xlu0 %1216, %v1059
      %v1218 = vpop.permute.xlu0 %1217
      %1221 = vset.pattern.permute.xlu0 0
      %1222 = vperm.xlu0 %1221, %v1060
      %v1223 = vpop.permute.xlu0 %1222
      %1226 = vset.pattern.permute.xlu0 0
      %1227 = vperm.xlu0 %1226, %v1061
      %v1228 = vpop.permute.xlu0 %1227
      %1231 = vset.pattern.permute.xlu0 0
      %1232 = vperm.xlu0 %1231, %v1062
      %v1233 = vpop.permute.xlu0 %1232
      %1236 = vset.pattern.permute.xlu0 0
      %1237 = vperm.xlu0 %1236, %v1063
      %v1238 = vpop.permute.xlu0 %1237
      %1241 = vset.pattern.permute.xlu0 0
      %1242 = vperm.xlu0 %1241, %v1064
      %v1243 = vpop.permute.xlu0 %1242
      %1246 = vset.pattern.permute.xlu0 0
      %1247 = vperm.xlu0 %1246, %v1065
      %v1248 = vpop.permute.xlu0 %1247
      %1251 = vset.pattern.permute.xlu0 0
      %1252 = vperm.xlu0 %1251, %v1066
      %v1253 = vpop.permute.xlu0 %1252
      %1256 = vset.pattern.permute.xlu0 0
      %1257 = vperm.xlu0 %1256, %v1067
      %v1258 = vpop.permute.xlu0 %1257
      %1261 = vset.pattern.permute.xlu0 0
      %1262 = vperm.xlu0 %1261, %v1068
      %v1263 = vpop.permute.xlu0 %1262
      %1266 = vset.pattern.permute.xlu0 0
      %1267 = vperm.xlu0 %1266, %v1069
      %v1268 = vpop.permute.xlu0 %1267
      %1271 = vset.pattern.permute.xlu0 0
      %1272 = vperm.xlu0 %1271, %v1070
      %v1273 = vpop.permute.xlu0 %1272
      %1276 = vset.pattern.permute.xlu0 0
      %1277 = vperm.xlu0 %1276, %v1071
      %v1278 = vpop.permute.xlu0 %1277
      %1281 = vset.pattern.permute.xlu0 0
      %1282 = vperm.xlu0 %1281, %v1072
      %v1283 = vpop.permute.xlu0 %1282
      %1286 = vset.pattern.permute.xlu0 0
      %1287 = vperm.xlu0 %1286, %v1073
      %v1288 = vpop.permute.xlu0 %1287
      %1291 = vset.pattern.permute.xlu0 0
      %1292 = vperm.xlu0 %1291, %v1074
      %v1293 = vpop.permute.xlu0 %1292
      %1296 = vset.pattern.permute.xlu0 0
      %1297 = vperm.xlu0 %1296, %v1075
      %v1298 = vpop.permute.xlu0 %1297
      %1301 = vset.pattern.permute.xlu0 0
      %1302 = vperm.xlu0 %1301, %v1076
      %v1303 = vpop.permute.xlu0 %1302
      %1306 = vset.pattern.permute.xlu0 0
      %1307 = vperm.xlu0 %1306, %v1077
      %v1308 = vpop.permute.xlu0 %1307
      %1311 = vset.pattern.permute.xlu0 0
      %1312 = vperm.xlu0 %1311, %v1078
      %v1313 = vpop.permute.xlu0 %1312
      %1316 = vset.pattern.permute.xlu0 0
      %1317 = vperm.xlu0 %1316, %v1079
      %v1318 = vpop.permute.xlu0 %1317
      %v1320 = vmul.f32 %v984, %v1083
      %v1321 = vmul.f32 %v985, %v1088
      %v1322 = vmul.f32 %v986, %v1093
      %v1323 = vmul.f32 %v987, %v1098
      %v1324 = vmul.f32 %v988, %v1103
      %v1325 = vmul.f32 %v989, %v1108
      %v1326 = vmul.f32 %v990, %v1113
      %v1327 = vmul.f32 %v991, %v1118
      %v1328 = vmul.f32 %v992, %v1123
      %v1329 = vmul.f32 %v993, %v1128
      %v1330 = vmul.f32 %v994, %v1133
      %v1331 = vmul.f32 %v995, %v1138
      %v1332 = vmul.f32 %v996, %v1143
      %v1333 = vmul.f32 %v997, %v1148
      %v1334 = vmul.f32 %v998, %v1153
      %v1335 = vmul.f32 %v999, %v1158
      %v1336 = vmul.f32 %v1000, %v1163
      %v1337 = vmul.f32 %v1001, %v1168
      %v1338 = vmul.f32 %v1002, %v1173
      %v1339 = vmul.f32 %v1003, %v1178
      %v1340 = vmul.f32 %v1004, %v1183
      %v1341 = vmul.f32 %v1005, %v1188
      %v1342 = vmul.f32 %v1006, %v1193
      %v1343 = vmul.f32 %v1007, %v1198
      %v1344 = vmul.f32 %v1008, %v1203
      %v1345 = vmul.f32 %v1009, %v1208
      %v1346 = vmul.f32 %v1010, %v1213
      %v1347 = vmul.f32 %v1011, %v1218
      %v1348 = vmul.f32 %v1012, %v1223
      %v1349 = vmul.f32 %v1013, %v1228
      %v1350 = vmul.f32 %v1014, %v1233
      %v1351 = vmul.f32 %v1015, %v1238
      %v1352 = vmul.f32 %v1016, %v1243
      %v1353 = vmul.f32 %v1017, %v1248
      %v1354 = vmul.f32 %v1018, %v1253
      %v1355 = vmul.f32 %v1019, %v1258
      %v1356 = vmul.f32 %v1020, %v1263
      %v1357 = vmul.f32 %v1021, %v1268
      %v1358 = vmul.f32 %v1022, %v1273
      %v1359 = vmul.f32 %v1023, %v1278
      %v1360 = vmul.f32 %v1024, %v1283
      %v1361 = vmul.f32 %v1025, %v1288
      %v1362 = vmul.f32 %v1026, %v1293
      %v1363 = vmul.f32 %v1027, %v1298
      %v1364 = vmul.f32 %v1028, %v1303
      %v1365 = vmul.f32 %v1029, %v1308
      %v1366 = vmul.f32 %v1030, %v1313
      %v1367 = vmul.f32 %v1031, %v1318
      %v1368 = vld [vmem:[%s2] sm:$0xff]
      %v1369 = vld [vmem:[%s2 + $0x8] sm:$0xff]
      %v1370 = vld [vmem:[%s2 + $0x10] sm:$0xff]
      %v1371 = vld [vmem:[%s2 + $0x18] sm:$0xff]
      %v1372 = vld [vmem:[%s2 + $0x20] sm:$0xff]
      %v1373 = vld [vmem:[%s2 + $0x28] sm:$0xff]
      %v1374 = vld [vmem:[%s2 + $0x30] sm:$0xff]
      %v1375 = vld [vmem:[%s2 + $0x38] sm:$0xff]
      %v1376 = vld [vmem:[%s2 + $0x40] sm:$0xff]
      %v1377 = vld [vmem:[%s2 + $0x48] sm:$0xff]
      %v1378 = vld [vmem:[%s2 + $0x50] sm:$0xff]
      %v1379 = vld [vmem:[%s2 + $0x58] sm:$0xff]
      %v1380 = vld [vmem:[%s2 + $0x60] sm:$0xff]
      %v1381 = vld [vmem:[%s2 + $0x68] sm:$0xff]
      %v1382 = vld [vmem:[%s2 + $0x70] sm:$0xff]
      %v1383 = vld [vmem:[%s2 + $0x78] sm:$0xff]
      %v1384 = vld [vmem:[%s2 + $0x80] sm:$0xff]
      %v1385 = vld [vmem:[%s2 + $0x88] sm:$0xff]
      %v1386 = vld [vmem:[%s2 + $0x90] sm:$0xff]
      %v1387 = vld [vmem:[%s2 + $0x98] sm:$0xff]
      %v1388 = vld [vmem:[%s2 + $0xa0] sm:$0xff]
      %v1389 = vld [vmem:[%s2 + $0xa8] sm:$0xff]
      %v1390 = vld [vmem:[%s2 + $0xb0] sm:$0xff]
      %v1391 = vld [vmem:[%s2 + $0xb8] sm:$0xff]
      %v1392 = vld [vmem:[%s2 + $0xc0] sm:$0xff]
      %v1393 = vld [vmem:[%s2 + $0xc8] sm:$0xff]
      %v1394 = vld [vmem:[%s2 + $0xd0] sm:$0xff]
      %v1395 = vld [vmem:[%s2 + $0xd8] sm:$0xff]
      %v1396 = vld [vmem:[%s2 + $0xe0] sm:$0xff]
      %v1397 = vld [vmem:[%s2 + $0xe8] sm:$0xff]
      %v1398 = vld [vmem:[%s2 + $0xf0] sm:$0xff]
      %v1399 = vld [vmem:[%s2 + $0xf8] sm:$0xff]
      %v1400 = vld [vmem:[%s2 + $0x100] sm:$0xff]
      %v1401 = vld [vmem:[%s2 + $0x108] sm:$0xff]
      %v1402 = vld [vmem:[%s2 + $0x110] sm:$0xff]
      %v1403 = vld [vmem:[%s2 + $0x118] sm:$0xff]
      %v1404 = vld [vmem:[%s2 + $0x120] sm:$0xff]
      %v1405 = vld [vmem:[%s2 + $0x128] sm:$0xff]
      %v1406 = vld [vmem:[%s2 + $0x130] sm:$0xff]
      %v1407 = vld [vmem:[%s2 + $0x138] sm:$0xff]
      %v1408 = vld [vmem:[%s2 + $0x140] sm:$0xff]
      %v1409 = vld [vmem:[%s2 + $0x148] sm:$0xff]
      %v1410 = vld [vmem:[%s2 + $0x150] sm:$0xff]
      %v1411 = vld [vmem:[%s2 + $0x158] sm:$0xff]
      %v1412 = vld [vmem:[%s2 + $0x160] sm:$0xff]
      %v1413 = vld [vmem:[%s2 + $0x168] sm:$0xff]
      %v1414 = vld [vmem:[%s2 + $0x170] sm:$0xff]
      %v1415 = vld [vmem:[%s2 + $0x178] sm:$0xff]
      %v1416 = vld [vmem:[%s4] sm:$0xff]
      %v1417 = vld [vmem:[%s4 + $0x8] sm:$0xff]
      %v1418 = vld [vmem:[%s5] sm:$0xff]
      %v1419 = vld [vmem:[%s5 + $0x8] sm:$0xff]
      %v1421 = vsel %vm932, %v1320, 0
      %v1424 = vsel %vm932, %v1321, 0
      %v1427 = vsel %vm932, %v1322, 0
      %v1430 = vsel %vm932, %v1323, 0
      %v1433 = vsel %vm932, %v1324, 0
      %v1436 = vsel %vm932, %v1325, 0
      %v1439 = vsel %vm932, %v1326, 0
      %v1442 = vsel %vm932, %v1327, 0
      %v1445 = vsel %vm932, %v1328, 0
      %v1448 = vsel %vm932, %v1329, 0
      %v1451 = vsel %vm932, %v1330, 0
      %v1454 = vsel %vm932, %v1331, 0
      %v1457 = vsel %vm932, %v1332, 0
      %v1460 = vsel %vm932, %v1333, 0
      %v1463 = vsel %vm932, %v1334, 0
      %v1466 = vsel %vm932, %v1335, 0
      %v1469 = vsel %vm932, %v1336, 0
      %v1472 = vsel %vm932, %v1337, 0
      %v1475 = vsel %vm932, %v1338, 0
      %v1478 = vsel %vm932, %v1339, 0
      %v1481 = vsel %vm932, %v1340, 0
      %v1484 = vsel %vm932, %v1341, 0
      %v1487 = vsel %vm932, %v1342, 0
      %v1490 = vsel %vm932, %v1343, 0
      %v1493 = vsel %vm932, %v1344, 0
      %v1496 = vsel %vm932, %v1345, 0
      %v1499 = vsel %vm932, %v1346, 0
      %v1502 = vsel %vm932, %v1347, 0
      %v1505 = vsel %vm932, %v1348, 0
      %v1508 = vsel %vm932, %v1349, 0
      %v1511 = vsel %vm932, %v1350, 0
      %v1514 = vsel %vm932, %v1351, 0
      %v1517 = vsel %vm932, %v1352, 0
      %v1520 = vsel %vm932, %v1353, 0
      %v1523 = vsel %vm932, %v1354, 0
      %v1526 = vsel %vm932, %v1355, 0
      %v1529 = vsel %vm932, %v1356, 0
      %v1532 = vsel %vm932, %v1357, 0
      %v1535 = vsel %vm932, %v1358, 0
      %v1538 = vsel %vm932, %v1359, 0
      %v1541 = vsel %vm932, %v1360, 0
      %v1544 = vsel %vm932, %v1361, 0
      %v1547 = vsel %vm932, %v1362, 0
      %v1550 = vsel %vm932, %v1363, 0
      %v1553 = vsel %vm932, %v1364, 0
      %v1556 = vsel %vm932, %v1365, 0
      %v1559 = vsel %vm932, %v1366, 0
      %v1562 = vsel %vm932, %v1367, 0
      %1564 = vmatprep.subr.mxu0 0.0
      %1565 = vmatpush1.msra.mxu0 0.0
      %1566 = vmatprep.subr.mxu0 0.0
      %1567 = vmatpush1.msra.mxu0 0.0
      %1568 = vmatprep.subr.mxu0 0.0
      %1569 = vmatpush1.msra.mxu0 0.0
      %1570 = vmatprep.subr.mxu0 0.0
      %1571 = vmatpush1.msra.mxu0 0.0
      %1572 = vmatprep.subr.mxu0 0.0
      %1573 = vmatpush1.msra.mxu0 0.0
      %1574 = vmatprep.subr.mxu0 0.0
      %1575 = vmatpush1.msra.mxu0 0.0
      %1576 = vmatprep.subr.mxu0 0.0
      %1577 = vmatpush1.msra.mxu0 0.0
      %1578 = vmatprep.subr.mxu0 0.0
      %1579 = vmatpush1.msra.mxu0 0.0
      %1580 = vmatprep.subr.mxu0 0.0
      %1581 = vmatpush1.msra.mxu0 0.0
      %1582 = vmatprep.subr.mxu0 0.0
      %1583 = vmatpush1.msra.mxu0 0.0
      %1584 = vmatprep.subr.mxu0 0.0
      %1585 = vmatpush1.msra.mxu0 0.0
      %1586 = vmatprep.subr.mxu0 0.0
      %1587 = vmatpush1.msra.mxu0 0.0
      %1588 = vmatprep.subr.mxu0 0.0
      %1589 = vmatpush1.msra.mxu0 0.0
      %1590 = vmatprep.subr.mxu0 0.0
      %1591 = vmatpush1.msra.mxu0 0.0
      %1592 = vmatprep.subr.mxu0 0.0
      %1593 = vmatpush1.msra.mxu0 %v1419
      %1594 = vmatprep.subr.mxu0 0.0
      %1595 = vmatpush1.msra.mxu0 %v1418
      %1596 = vmatprep.subr.mxu0 0.0
      %1597 = vmatpush2.msra.mxu0 0.0
      %1598 = vmatprep.subr.mxu0 0.0
      %1599 = vmatpush2.msra.mxu0 0.0
      %1600 = vmatprep.subr.mxu0 0.0
      %1601 = vmatpush2.msra.mxu0 0.0
      %1602 = vmatprep.subr.mxu0 0.0
      %1603 = vmatpush2.msra.mxu0 0.0
      %1604 = vmatprep.subr.mxu0 0.0
      %1605 = vmatpush2.msra.mxu0 0.0
      %1606 = vmatprep.subr.mxu0 0.0
      %1607 = vmatpush2.msra.mxu0 0.0
      %1608 = vmatprep.subr.mxu0 0.0
      %1609 = vmatpush2.msra.mxu0 0.0
      %1610 = vmatprep.subr.mxu0 0.0
      %1611 = vmatpush2.msra.mxu0 0.0
      %1612 = vmatprep.subr.mxu0 0.0
      %1613 = vmatpush2.msra.mxu0 0.0
      %1614 = vmatprep.subr.mxu0 0.0
      %1615 = vmatpush2.msra.mxu0 0.0
      %1616 = vmatprep.subr.mxu0 0.0
      %1617 = vmatpush2.msra.mxu0 0.0
      %1618 = vmatprep.subr.mxu0 0.0
      %1619 = vmatpush2.msra.mxu0 0.0
      %1620 = vmatprep.subr.mxu0 0.0
      %1621 = vmatpush2.msra.mxu0 0.0
      %1622 = vmatprep.subr.mxu0 0.0
      %1623 = vmatpush2.msra.mxu0 0.0
      %1624 = vmatprep.subr.mxu0 0.0
      %1625 = vmatpush2.msra.mxu0 0.0
      %1626 = vmatprep.subr.mxu0 0.0
      %1627 = vmatpush2.msra.mxu0 0.0
      %1628 = vmatprep.mubr.f32.mxu0 0.0
      %1629 = vmatmul.mubr.f32.gmra.mxu0 %v1421
      %v1630 = vpop.f32.mrf.mxu0
      %v1631 = vadd.f32 0.0, %v1630
      %v1632 = vpop.f32.mrf.mxu0
      %1633 = vmatprep.mubr.f32.mxu0 0.0
      %1634 = vmatmul.mubr.f32.gmra.mxu0 %v1424
      %v1635 = vpop.f32.mrf.mxu0
      %v1636 = vadd.f32 0.0, %v1635
      %v1637 = vpop.f32.mrf.mxu0
      %1638 = vmatprep.mubr.f32.mxu0 0.0
      %1639 = vmatmul.mubr.f32.gmra.mxu0 %v1427
      %v1640 = vpop.f32.mrf.mxu0
      %v1641 = vadd.f32 0.0, %v1640
      %v1642 = vpop.f32.mrf.mxu0
      %1643 = vmatprep.mubr.f32.mxu0 0.0
      %1644 = vmatmul.mubr.f32.gmra.mxu0 %v1430
      %v1645 = vpop.f32.mrf.mxu0
      %v1646 = vadd.f32 0.0, %v1645
      %v1647 = vpop.f32.mrf.mxu0
      %1648 = vmatprep.mubr.f32.mxu0 0.0
      %1649 = vmatmul.mubr.f32.gmra.mxu0 %v1433
      %v1650 = vpop.f32.mrf.mxu0
      %v1651 = vadd.f32 0.0, %v1650
      %v1652 = vpop.f32.mrf.mxu0
      %1653 = vmatprep.mubr.f32.mxu0 0.0
      %1654 = vmatmul.mubr.f32.gmra.mxu0 %v1436
      %v1655 = vpop.f32.mrf.mxu0
      %v1656 = vadd.f32 0.0, %v1655
      %v1657 = vpop.f32.mrf.mxu0
      %1658 = vmatprep.mubr.f32.mxu0 0.0
      %1659 = vmatmul.mubr.f32.gmra.mxu0 %v1439
      %v1660 = vpop.f32.mrf.mxu0
      %v1661 = vadd.f32 0.0, %v1660
      %v1662 = vpop.f32.mrf.mxu0
      %1663 = vmatprep.mubr.f32.mxu0 0.0
      %1664 = vmatmul.mubr.f32.gmra.mxu0 %v1442
      %v1665 = vpop.f32.mrf.mxu0
      %v1666 = vadd.f32 0.0, %v1665
      %v1667 = vpop.f32.mrf.mxu0
      %1668 = vmatprep.mubr.f32.mxu0 0.0
      %1669 = vmatmul.mubr.f32.gmra.mxu0 %v1445
      %v1670 = vpop.f32.mrf.mxu0
      %v1671 = vadd.f32 0.0, %v1670
      %v1672 = vpop.f32.mrf.mxu0
      %1673 = vmatprep.mubr.f32.mxu0 0.0
      %1674 = vmatmul.mubr.f32.gmra.mxu0 %v1448
      %v1675 = vpop.f32.mrf.mxu0
      %v1676 = vadd.f32 0.0, %v1675
      %v1677 = vpop.f32.mrf.mxu0
      %1678 = vmatprep.mubr.f32.mxu0 0.0
      %1679 = vmatmul.mubr.f32.gmra.mxu0 %v1451
      %v1680 = vpop.f32.mrf.mxu0
      %v1681 = vadd.f32 0.0, %v1680
      %v1682 = vpop.f32.mrf.mxu0
      %1683 = vmatprep.mubr.f32.mxu0 0.0
      %1684 = vmatmul.mubr.f32.gmra.mxu0 %v1454
      %v1685 = vpop.f32.mrf.mxu0
      %v1686 = vadd.f32 0.0, %v1685
      %v1687 = vpop.f32.mrf.mxu0
      %1688 = vmatprep.mubr.f32.mxu0 0.0
      %1689 = vmatmul.mubr.f32.gmra.mxu0 %v1457
      %v1690 = vpop.f32.mrf.mxu0
      %v1691 = vadd.f32 0.0, %v1690
      %v1692 = vpop.f32.mrf.mxu0
      %1693 = vmatprep.mubr.f32.mxu0 0.0
      %1694 = vmatmul.mubr.f32.gmra.mxu0 %v1460
      %v1695 = vpop.f32.mrf.mxu0
      %v1696 = vadd.f32 0.0, %v1695
      %v1697 = vpop.f32.mrf.mxu0
      %1698 = vmatprep.mubr.f32.mxu0 0.0
      %1699 = vmatmul.mubr.f32.gmra.mxu0 %v1463
      %v1700 = vpop.f32.mrf.mxu0
      %v1701 = vadd.f32 0.0, %v1700
      %v1702 = vpop.f32.mrf.mxu0
      %1703 = vmatprep.mubr.f32.mxu0 0.0
      %1704 = vmatmul.mubr.f32.gmra.mxu0 %v1466
      %v1705 = vpop.f32.mrf.mxu0
      %v1706 = vadd.f32 0.0, %v1705
      %v1707 = vpop.f32.mrf.mxu0
      %1708 = vmatprep.mubr.f32.mxu0 0.0
      %1709 = vmatmul.mubr.f32.gmra.mxu0 %v1469
      %v1710 = vpop.f32.mrf.mxu0
      %v1711 = vadd.f32 0.0, %v1710
      %v1712 = vpop.f32.mrf.mxu0
      %1713 = vmatprep.mubr.f32.mxu0 0.0
      %1714 = vmatmul.mubr.f32.gmra.mxu0 %v1472
      %v1715 = vpop.f32.mrf.mxu0
      %v1716 = vadd.f32 0.0, %v1715
      %v1717 = vpop.f32.mrf.mxu0
      %1718 = vmatprep.mubr.f32.mxu0 0.0
      %1719 = vmatmul.mubr.f32.gmra.mxu0 %v1475
      %v1720 = vpop.f32.mrf.mxu0
      %v1721 = vadd.f32 0.0, %v1720
      %v1722 = vpop.f32.mrf.mxu0
      %1723 = vmatprep.mubr.f32.mxu0 0.0
      %1724 = vmatmul.mubr.f32.gmra.mxu0 %v1478
      %v1725 = vpop.f32.mrf.mxu0
      %v1726 = vadd.f32 0.0, %v1725
      %v1727 = vpop.f32.mrf.mxu0
      %1728 = vmatprep.mubr.f32.mxu0 0.0
      %1729 = vmatmul.mubr.f32.gmra.mxu0 %v1481
      %v1730 = vpop.f32.mrf.mxu0
      %v1731 = vadd.f32 0.0, %v1730
      %v1732 = vpop.f32.mrf.mxu0
      %1733 = vmatprep.mubr.f32.mxu0 0.0
      %1734 = vmatmul.mubr.f32.gmra.mxu0 %v1484
      %v1735 = vpop.f32.mrf.mxu0
      %v1736 = vadd.f32 0.0, %v1735
      %v1737 = vpop.f32.mrf.mxu0
      %1738 = vmatprep.mubr.f32.mxu0 0.0
      %1739 = vmatmul.mubr.f32.gmra.mxu0 %v1487
      %v1740 = vpop.f32.mrf.mxu0
      %v1741 = vadd.f32 0.0, %v1740
      %v1742 = vpop.f32.mrf.mxu0
      %1743 = vmatprep.mubr.f32.mxu0 0.0
      %1744 = vmatmul.mubr.f32.gmra.mxu0 %v1490
      %v1745 = vpop.f32.mrf.mxu0
      %v1746 = vadd.f32 0.0, %v1745
      %v1747 = vpop.f32.mrf.mxu0
      %1748 = vmatprep.mubr.f32.mxu0 0.0
      %1749 = vmatmul.mubr.f32.gmra.mxu0 %v1493
      %v1750 = vpop.f32.mrf.mxu0
      %v1751 = vadd.f32 0.0, %v1750
      %v1752 = vpop.f32.mrf.mxu0
      %1753 = vmatprep.mubr.f32.mxu0 0.0
      %1754 = vmatmul.mubr.f32.gmra.mxu0 %v1496
      %v1755 = vpop.f32.mrf.mxu0
      %v1756 = vadd.f32 0.0, %v1755
      %v1757 = vpop.f32.mrf.mxu0
      %1758 = vmatprep.mubr.f32.mxu0 0.0
      %1759 = vmatmul.mubr.f32.gmra.mxu0 %v1499
      %v1760 = vpop.f32.mrf.mxu0
      %v1761 = vadd.f32 0.0, %v1760
      %v1762 = vpop.f32.mrf.mxu0
      %1763 = vmatprep.mubr.f32.mxu0 0.0
      %1764 = vmatmul.mubr.f32.gmra.mxu0 %v1502
      %v1765 = vpop.f32.mrf.mxu0
      %v1766 = vadd.f32 0.0, %v1765
      %v1767 = vpop.f32.mrf.mxu0
      %1768 = vmatprep.mubr.f32.mxu0 0.0
      %1769 = vmatmul.mubr.f32.gmra.mxu0 %v1505
      %v1770 = vpop.f32.mrf.mxu0
      %v1771 = vadd.f32 0.0, %v1770
      %v1772 = vpop.f32.mrf.mxu0
      %1773 = vmatprep.mubr.f32.mxu0 0.0
      %1774 = vmatmul.mubr.f32.gmra.mxu0 %v1508
      %v1775 = vpop.f32.mrf.mxu0
      %v1776 = vadd.f32 0.0, %v1775
      %v1777 = vpop.f32.mrf.mxu0
      %1778 = vmatprep.mubr.f32.mxu0 0.0
      %1779 = vmatmul.mubr.f32.gmra.mxu0 %v1511
      %v1780 = vpop.f32.mrf.mxu0
      %v1781 = vadd.f32 0.0, %v1780
      %v1782 = vpop.f32.mrf.mxu0
      %1783 = vmatprep.mubr.f32.mxu0 0.0
      %1784 = vmatmul.mubr.f32.gmra.mxu0 %v1514
      %v1785 = vpop.f32.mrf.mxu0
      %v1786 = vadd.f32 0.0, %v1785
      %v1787 = vpop.f32.mrf.mxu0
      %1788 = vmatprep.mubr.f32.mxu0 0.0
      %1789 = vmatmul.mubr.f32.gmra.mxu0 %v1517
      %v1790 = vpop.f32.mrf.mxu0
      %v1791 = vadd.f32 0.0, %v1790
      %v1792 = vpop.f32.mrf.mxu0
      %1793 = vmatprep.mubr.f32.mxu0 0.0
      %1794 = vmatmul.mubr.f32.gmra.mxu0 %v1520
      %v1795 = vpop.f32.mrf.mxu0
      %v1796 = vadd.f32 0.0, %v1795
      %v1797 = vpop.f32.mrf.mxu0
      %1798 = vmatprep.mubr.f32.mxu0 0.0
      %1799 = vmatmul.mubr.f32.gmra.mxu0 %v1523
      %v1800 = vpop.f32.mrf.mxu0
      %v1801 = vadd.f32 0.0, %v1800
      %v1802 = vpop.f32.mrf.mxu0
      %1803 = vmatprep.mubr.f32.mxu0 0.0
      %1804 = vmatmul.mubr.f32.gmra.mxu0 %v1526
      %v1805 = vpop.f32.mrf.mxu0
      %v1806 = vadd.f32 0.0, %v1805
      %v1807 = vpop.f32.mrf.mxu0
      %1808 = vmatprep.mubr.f32.mxu0 0.0
      %1809 = vmatmul.mubr.f32.gmra.mxu0 %v1529
      %v1810 = vpop.f32.mrf.mxu0
      %v1811 = vadd.f32 0.0, %v1810
      %v1812 = vpop.f32.mrf.mxu0
      %1813 = vmatprep.mubr.f32.mxu0 0.0
      %1814 = vmatmul.mubr.f32.gmra.mxu0 %v1532
      %v1815 = vpop.f32.mrf.mxu0
      %v1816 = vadd.f32 0.0, %v1815
      %v1817 = vpop.f32.mrf.mxu0
      %1818 = vmatprep.mubr.f32.mxu0 0.0
      %1819 = vmatmul.mubr.f32.gmra.mxu0 %v1535
      %v1820 = vpop.f32.mrf.mxu0
      %v1821 = vadd.f32 0.0, %v1820
      %v1822 = vpop.f32.mrf.mxu0
      %1823 = vmatprep.mubr.f32.mxu0 0.0
      %1824 = vmatmul.mubr.f32.gmra.mxu0 %v1538
      %v1825 = vpop.f32.mrf.mxu0
      %v1826 = vadd.f32 0.0, %v1825
      %v1827 = vpop.f32.mrf.mxu0
      %1828 = vmatprep.mubr.f32.mxu0 0.0
      %1829 = vmatmul.mubr.f32.gmra.mxu0 %v1541
      %v1830 = vpop.f32.mrf.mxu0
      %v1831 = vadd.f32 0.0, %v1830
      %v1832 = vpop.f32.mrf.mxu0
      %1833 = vmatprep.mubr.f32.mxu0 0.0
      %1834 = vmatmul.mubr.f32.gmra.mxu0 %v1544
      %v1835 = vpop.f32.mrf.mxu0
      %v1836 = vadd.f32 0.0, %v1835
      %v1837 = vpop.f32.mrf.mxu0
      %1838 = vmatprep.mubr.f32.mxu0 0.0
      %1839 = vmatmul.mubr.f32.gmra.mxu0 %v1547
      %v1840 = vpop.f32.mrf.mxu0
      %v1841 = vadd.f32 0.0, %v1840
      %v1842 = vpop.f32.mrf.mxu0
      %1843 = vmatprep.mubr.f32.mxu0 0.0
      %1844 = vmatmul.mubr.f32.gmra.mxu0 %v1550
      %v1845 = vpop.f32.mrf.mxu0
      %v1846 = vadd.f32 0.0, %v1845
      %v1847 = vpop.f32.mrf.mxu0
      %1848 = vmatprep.mubr.f32.mxu0 0.0
      %1849 = vmatmul.mubr.f32.gmra.mxu0 %v1553
      %v1850 = vpop.f32.mrf.mxu0
      %v1851 = vadd.f32 0.0, %v1850
      %v1852 = vpop.f32.mrf.mxu0
      %1853 = vmatprep.mubr.f32.mxu0 0.0
      %1854 = vmatmul.mubr.f32.gmra.mxu0 %v1556
      %v1855 = vpop.f32.mrf.mxu0
      %v1856 = vadd.f32 0.0, %v1855
      %v1857 = vpop.f32.mrf.mxu0
      %1858 = vmatprep.mubr.f32.mxu0 0.0
      %1859 = vmatmul.mubr.f32.gmra.mxu0 %v1559
      %v1860 = vpop.f32.mrf.mxu0
      %v1861 = vadd.f32 0.0, %v1860
      %v1862 = vpop.f32.mrf.mxu0
      %1863 = vmatprep.mubr.f32.mxu0 0.0
      %1864 = vmatmul.mubr.f32.gmra.mxu0 %v1562
      %v1865 = vpop.f32.mrf.mxu0
      %v1866 = vadd.f32 0.0, %v1865
      %v1867 = vpop.f32.mrf.mxu0
      %1868 = vdwg.mxu0
      %v1870 = vsel %vm932, %v1368, 0
      %v1873 = vsel %vm932, %v1369, 0
      %v1876 = vsel %vm932, %v1370, 0
      %v1879 = vsel %vm932, %v1371, 0
      %v1882 = vsel %vm932, %v1372, 0
      %v1885 = vsel %vm932, %v1373, 0
      %v1888 = vsel %vm932, %v1374, 0
      %v1891 = vsel %vm932, %v1375, 0
      %v1894 = vsel %vm932, %v1376, 0
      %v1897 = vsel %vm932, %v1377, 0
      %v1900 = vsel %vm932, %v1378, 0
      %v1903 = vsel %vm932, %v1379, 0
      %v1906 = vsel %vm932, %v1380, 0
      %v1909 = vsel %vm932, %v1381, 0
      %v1912 = vsel %vm932, %v1382, 0
      %v1915 = vsel %vm932, %v1383, 0
      %v1918 = vsel %vm932, %v1384, 0
      %v1921 = vsel %vm932, %v1385, 0
      %v1924 = vsel %vm932, %v1386, 0
      %v1927 = vsel %vm932, %v1387, 0
      %v1930 = vsel %vm932, %v1388, 0
      %v1933 = vsel %vm932, %v1389, 0
      %v1936 = vsel %vm932, %v1390, 0
      %v1939 = vsel %vm932, %v1391, 0
      %v1942 = vsel %vm932, %v1392, 0
      %v1945 = vsel %vm932, %v1393, 0
      %v1948 = vsel %vm932, %v1394, 0
      %v1951 = vsel %vm932, %v1395, 0
      %v1954 = vsel %vm932, %v1396, 0
      %v1957 = vsel %vm932, %v1397, 0
      %v1960 = vsel %vm932, %v1398, 0
      %v1963 = vsel %vm932, %v1399, 0
      %v1966 = vsel %vm932, %v1400, 0
      %v1969 = vsel %vm932, %v1401, 0
      %v1972 = vsel %vm932, %v1402, 0
      %v1975 = vsel %vm932, %v1403, 0
      %v1978 = vsel %vm932, %v1404, 0
      %v1981 = vsel %vm932, %v1405, 0
      %v1984 = vsel %vm932, %v1406, 0
      %v1987 = vsel %vm932, %v1407, 0
      %v1990 = vsel %vm932, %v1408, 0
      %v1993 = vsel %vm932, %v1409, 0
      %v1996 = vsel %vm932, %v1410, 0
      %v1999 = vsel %vm932, %v1411, 0
      %v2002 = vsel %vm932, %v1412, 0
      %v2005 = vsel %vm932, %v1413, 0
      %v2008 = vsel %vm932, %v1414, 0
      %v2011 = vsel %vm932, %v1415, 0
      %2013 = vmatprep.subr.mxu0 0.0
      %2014 = vmatpush1.msra.mxu0 0.0
      %2015 = vmatprep.subr.mxu0 0.0
      %2016 = vmatpush1.msra.mxu0 0.0
      %2017 = vmatprep.subr.mxu0 0.0
      %2018 = vmatpush1.msra.mxu0 0.0
      %2019 = vmatprep.subr.mxu0 0.0
      %2020 = vmatpush1.msra.mxu0 0.0
      %2021 = vmatprep.subr.mxu0 0.0
      %2022 = vmatpush1.msra.mxu0 0.0
      %2023 = vmatprep.subr.mxu0 0.0
      %2024 = vmatpush1.msra.mxu0 0.0
      %2025 = vmatprep.subr.mxu0 0.0
      %2026 = vmatpush1.msra.mxu0 0.0
      %2027 = vmatprep.subr.mxu0 0.0
      %2028 = vmatpush1.msra.mxu0 0.0
      %2029 = vmatprep.subr.mxu0 0.0
      %2030 = vmatpush1.msra.mxu0 0.0
      %2031 = vmatprep.subr.mxu0 0.0
      %2032 = vmatpush1.msra.mxu0 0.0
      %2033 = vmatprep.subr.mxu0 0.0
      %2034 = vmatpush1.msra.mxu0 0.0
      %2035 = vmatprep.subr.mxu0 0.0
      %2036 = vmatpush1.msra.mxu0 0.0
      %2037 = vmatprep.subr.mxu0 0.0
      %2038 = vmatpush1.msra.mxu0 0.0
      %2039 = vmatprep.subr.mxu0 0.0
      %2040 = vmatpush1.msra.mxu0 0.0
      %2041 = vmatprep.subr.mxu0 0.0
      %2042 = vmatpush1.msra.mxu0 %v1417
      %2043 = vmatprep.subr.mxu0 0.0
      %2044 = vmatpush1.msra.mxu0 %v1416
      %2045 = vmatprep.subr.mxu0 0.0
      %2046 = vmatpush2.msra.mxu0 0.0
      %2047 = vmatprep.subr.mxu0 0.0
      %2048 = vmatpush2.msra.mxu0 0.0
      %2049 = vmatprep.subr.mxu0 0.0
      %2050 = vmatpush2.msra.mxu0 0.0
      %2051 = vmatprep.subr.mxu0 0.0
      %2052 = vmatpush2.msra.mxu0 0.0
      %2053 = vmatprep.subr.mxu0 0.0
      %2054 = vmatpush2.msra.mxu0 0.0
      %2055 = vmatprep.subr.mxu0 0.0
      %2056 = vmatpush2.msra.mxu0 0.0
      %2057 = vmatprep.subr.mxu0 0.0
      %2058 = vmatpush2.msra.mxu0 0.0
      %2059 = vmatprep.subr.mxu0 0.0
      %2060 = vmatpush2.msra.mxu0 0.0
      %2061 = vmatprep.subr.mxu0 0.0
      %2062 = vmatpush2.msra.mxu0 0.0
      %2063 = vmatprep.subr.mxu0 0.0
      %2064 = vmatpush2.msra.mxu0 0.0
      %2065 = vmatprep.subr.mxu0 0.0
      %2066 = vmatpush2.msra.mxu0 0.0
      %2067 = vmatprep.subr.mxu0 0.0
      %2068 = vmatpush2.msra.mxu0 0.0
      %2069 = vmatprep.subr.mxu0 0.0
      %2070 = vmatpush2.msra.mxu0 0.0
      %2071 = vmatprep.subr.mxu0 0.0
      %2072 = vmatpush2.msra.mxu0 0.0
      %2073 = vmatprep.subr.mxu0 0.0
      %2074 = vmatpush2.msra.mxu0 0.0
      %2075 = vmatprep.subr.mxu0 0.0
      %2076 = vmatpush2.msra.mxu0 0.0
      %2077 = vmatprep.mubr.f32.mxu0 0.0
      %2078 = vmatmul.mubr.f32.gmra.mxu0 %v1870
      %v2079 = vpop.f32.mrf.mxu0
      %v2080 = vadd.f32 %v1631, %v2079
      %v2081 = vpop.f32.mrf.mxu0
      %2082 = vmatprep.mubr.f32.mxu0 0.0
      %2083 = vmatmul.mubr.f32.gmra.mxu0 %v1873
      %v2084 = vpop.f32.mrf.mxu0
      %v2085 = vadd.f32 %v1636, %v2084
      %v2086 = vpop.f32.mrf.mxu0
      %2087 = vmatprep.mubr.f32.mxu0 0.0
      %2088 = vmatmul.mubr.f32.gmra.mxu0 %v1876
      %v2089 = vpop.f32.mrf.mxu0
      %v2090 = vadd.f32 %v1641, %v2089
      %v2091 = vpop.f32.mrf.mxu0
      %2092 = vmatprep.mubr.f32.mxu0 0.0
      %2093 = vmatmul.mubr.f32.gmra.mxu0 %v1879
      %v2094 = vpop.f32.mrf.mxu0
      %v2095 = vadd.f32 %v1646, %v2094
      %v2096 = vpop.f32.mrf.mxu0
      %2097 = vmatprep.mubr.f32.mxu0 0.0
      %2098 = vmatmul.mubr.f32.gmra.mxu0 %v1882
      %v2099 = vpop.f32.mrf.mxu0
      %v2100 = vadd.f32 %v1651, %v2099
      %v2101 = vpop.f32.mrf.mxu0
      %2102 = vmatprep.mubr.f32.mxu0 0.0
      %2103 = vmatmul.mubr.f32.gmra.mxu0 %v1885
      %v2104 = vpop.f32.mrf.mxu0
      %v2105 = vadd.f32 %v1656, %v2104
      %v2106 = vpop.f32.mrf.mxu0
      %2107 = vmatprep.mubr.f32.mxu0 0.0
      %2108 = vmatmul.mubr.f32.gmra.mxu0 %v1888
      %v2109 = vpop.f32.mrf.mxu0
      %v2110 = vadd.f32 %v1661, %v2109
      %v2111 = vpop.f32.mrf.mxu0
      %2112 = vmatprep.mubr.f32.mxu0 0.0
      %2113 = vmatmul.mubr.f32.gmra.mxu0 %v1891
      %v2114 = vpop.f32.mrf.mxu0
      %v2115 = vadd.f32 %v1666, %v2114
      %v2116 = vpop.f32.mrf.mxu0
      %2117 = vmatprep.mubr.f32.mxu0 0.0
      %2118 = vmatmul.mubr.f32.gmra.mxu0 %v1894
      %v2119 = vpop.f32.mrf.mxu0
      %v2120 = vadd.f32 %v1671, %v2119
      %v2121 = vpop.f32.mrf.mxu0
      %2122 = vmatprep.mubr.f32.mxu0 0.0
      %2123 = vmatmul.mubr.f32.gmra.mxu0 %v1897
      %v2124 = vpop.f32.mrf.mxu0
      %v2125 = vadd.f32 %v1676, %v2124
      %v2126 = vpop.f32.mrf.mxu0
      %2127 = vmatprep.mubr.f32.mxu0 0.0
      %2128 = vmatmul.mubr.f32.gmra.mxu0 %v1900
      %v2129 = vpop.f32.mrf.mxu0
      %v2130 = vadd.f32 %v1681, %v2129
      %v2131 = vpop.f32.mrf.mxu0
      %2132 = vmatprep.mubr.f32.mxu0 0.0
      %2133 = vmatmul.mubr.f32.gmra.mxu0 %v1903
      %v2134 = vpop.f32.mrf.mxu0
      %v2135 = vadd.f32 %v1686, %v2134
      %v2136 = vpop.f32.mrf.mxu0
      %2137 = vmatprep.mubr.f32.mxu0 0.0
      %2138 = vmatmul.mubr.f32.gmra.mxu0 %v1906
      %v2139 = vpop.f32.mrf.mxu0
      %v2140 = vadd.f32 %v1691, %v2139
      %v2141 = vpop.f32.mrf.mxu0
      %2142 = vmatprep.mubr.f32.mxu0 0.0
      %2143 = vmatmul.mubr.f32.gmra.mxu0 %v1909
      %v2144 = vpop.f32.mrf.mxu0
      %v2145 = vadd.f32 %v1696, %v2144
      %v2146 = vpop.f32.mrf.mxu0
      %2147 = vmatprep.mubr.f32.mxu0 0.0
      %2148 = vmatmul.mubr.f32.gmra.mxu0 %v1912
      %v2149 = vpop.f32.mrf.mxu0
      %v2150 = vadd.f32 %v1701, %v2149
      %v2151 = vpop.f32.mrf.mxu0
      %2152 = vmatprep.mubr.f32.mxu0 0.0
      %2153 = vmatmul.mubr.f32.gmra.mxu0 %v1915
      %v2154 = vpop.f32.mrf.mxu0
      %v2155 = vadd.f32 %v1706, %v2154
      %v2156 = vpop.f32.mrf.mxu0
      %2157 = vmatprep.mubr.f32.mxu0 0.0
      %2158 = vmatmul.mubr.f32.gmra.mxu0 %v1918
      %v2159 = vpop.f32.mrf.mxu0
      %v2160 = vadd.f32 %v1711, %v2159
      %v2161 = vpop.f32.mrf.mxu0
      %2162 = vmatprep.mubr.f32.mxu0 0.0
      %2163 = vmatmul.mubr.f32.gmra.mxu0 %v1921
      %v2164 = vpop.f32.mrf.mxu0
      %v2165 = vadd.f32 %v1716, %v2164
      %v2166 = vpop.f32.mrf.mxu0
      %2167 = vmatprep.mubr.f32.mxu0 0.0
      %2168 = vmatmul.mubr.f32.gmra.mxu0 %v1924
      %v2169 = vpop.f32.mrf.mxu0
      %v2170 = vadd.f32 %v1721, %v2169
      %v2171 = vpop.f32.mrf.mxu0
      %2172 = vmatprep.mubr.f32.mxu0 0.0
      %2173 = vmatmul.mubr.f32.gmra.mxu0 %v1927
      %v2174 = vpop.f32.mrf.mxu0
      %v2175 = vadd.f32 %v1726, %v2174
      %v2176 = vpop.f32.mrf.mxu0
      %2177 = vmatprep.mubr.f32.mxu0 0.0
      %2178 = vmatmul.mubr.f32.gmra.mxu0 %v1930
      %v2179 = vpop.f32.mrf.mxu0
      %v2180 = vadd.f32 %v1731, %v2179
      %v2181 = vpop.f32.mrf.mxu0
      %2182 = vmatprep.mubr.f32.mxu0 0.0
      %2183 = vmatmul.mubr.f32.gmra.mxu0 %v1933
      %v2184 = vpop.f32.mrf.mxu0
      %v2185 = vadd.f32 %v1736, %v2184
      %v2186 = vpop.f32.mrf.mxu0
      %2187 = vmatprep.mubr.f32.mxu0 0.0
      %2188 = vmatmul.mubr.f32.gmra.mxu0 %v1936
      %v2189 = vpop.f32.mrf.mxu0
      %v2190 = vadd.f32 %v1741, %v2189
      %v2191 = vpop.f32.mrf.mxu0
      %2192 = vmatprep.mubr.f32.mxu0 0.0
      %2193 = vmatmul.mubr.f32.gmra.mxu0 %v1939
      %v2194 = vpop.f32.mrf.mxu0
      %v2195 = vadd.f32 %v1746, %v2194
      %v2196 = vpop.f32.mrf.mxu0
      %2197 = vmatprep.mubr.f32.mxu0 0.0
      %2198 = vmatmul.mubr.f32.gmra.mxu0 %v1942
      %v2199 = vpop.f32.mrf.mxu0
      %v2200 = vadd.f32 %v1751, %v2199
      %v2201 = vpop.f32.mrf.mxu0
      %2202 = vmatprep.mubr.f32.mxu0 0.0
      %2203 = vmatmul.mubr.f32.gmra.mxu0 %v1945
      %v2204 = vpop.f32.mrf.mxu0
      %v2205 = vadd.f32 %v1756, %v2204
      %v2206 = vpop.f32.mrf.mxu0
      %2207 = vmatprep.mubr.f32.mxu0 0.0
      %2208 = vmatmul.mubr.f32.gmra.mxu0 %v1948
      %v2209 = vpop.f32.mrf.mxu0
      %v2210 = vadd.f32 %v1761, %v2209
      %v2211 = vpop.f32.mrf.mxu0
      %2212 = vmatprep.mubr.f32.mxu0 0.0
      %2213 = vmatmul.mubr.f32.gmra.mxu0 %v1951
      %v2214 = vpop.f32.mrf.mxu0
      %v2215 = vadd.f32 %v1766, %v2214
      %v2216 = vpop.f32.mrf.mxu0
      %2217 = vmatprep.mubr.f32.mxu0 0.0
      %2218 = vmatmul.mubr.f32.gmra.mxu0 %v1954
      %v2219 = vpop.f32.mrf.mxu0
      %v2220 = vadd.f32 %v1771, %v2219
      %v2221 = vpop.f32.mrf.mxu0
      %2222 = vmatprep.mubr.f32.mxu0 0.0
      %2223 = vmatmul.mubr.f32.gmra.mxu0 %v1957
      %v2224 = vpop.f32.mrf.mxu0
      %v2225 = vadd.f32 %v1776, %v2224
      %v2226 = vpop.f32.mrf.mxu0
      %2227 = vmatprep.mubr.f32.mxu0 0.0
      %2228 = vmatmul.mubr.f32.gmra.mxu0 %v1960
      %v2229 = vpop.f32.mrf.mxu0
      %v2230 = vadd.f32 %v1781, %v2229
      %v2231 = vpop.f32.mrf.mxu0
      %2232 = vmatprep.mubr.f32.mxu0 0.0
      %2233 = vmatmul.mubr.f32.gmra.mxu0 %v1963
      %v2234 = vpop.f32.mrf.mxu0
      %v2235 = vadd.f32 %v1786, %v2234
      %v2236 = vpop.f32.mrf.mxu0
      %2237 = vmatprep.mubr.f32.mxu0 0.0
      %2238 = vmatmul.mubr.f32.gmra.mxu0 %v1966
      %v2239 = vpop.f32.mrf.mxu0
      %v2240 = vadd.f32 %v1791, %v2239
      %v2241 = vpop.f32.mrf.mxu0
      %2242 = vmatprep.mubr.f32.mxu0 0.0
      %2243 = vmatmul.mubr.f32.gmra.mxu0 %v1969
      %v2244 = vpop.f32.mrf.mxu0
      %v2245 = vadd.f32 %v1796, %v2244
      %v2246 = vpop.f32.mrf.mxu0
      %2247 = vmatprep.mubr.f32.mxu0 0.0
      %2248 = vmatmul.mubr.f32.gmra.mxu0 %v1972
      %v2249 = vpop.f32.mrf.mxu0
      %v2250 = vadd.f32 %v1801, %v2249
      %v2251 = vpop.f32.mrf.mxu0
      %2252 = vmatprep.mubr.f32.mxu0 0.0
      %2253 = vmatmul.mubr.f32.gmra.mxu0 %v1975
      %v2254 = vpop.f32.mrf.mxu0
      %v2255 = vadd.f32 %v1806, %v2254
      %v2256 = vpop.f32.mrf.mxu0
      %2257 = vmatprep.mubr.f32.mxu0 0.0
      %2258 = vmatmul.mubr.f32.gmra.mxu0 %v1978
      %v2259 = vpop.f32.mrf.mxu0
      %v2260 = vadd.f32 %v1811, %v2259
      %v2261 = vpop.f32.mrf.mxu0
      %2262 = vmatprep.mubr.f32.mxu0 0.0
      %2263 = vmatmul.mubr.f32.gmra.mxu0 %v1981
      %v2264 = vpop.f32.mrf.mxu0
      %v2265 = vadd.f32 %v1816, %v2264
      %v2266 = vpop.f32.mrf.mxu0
      %2267 = vmatprep.mubr.f32.mxu0 0.0
      %2268 = vmatmul.mubr.f32.gmra.mxu0 %v1984
      %v2269 = vpop.f32.mrf.mxu0
      %v2270 = vadd.f32 %v1821, %v2269
      %v2271 = vpop.f32.mrf.mxu0
      %2272 = vmatprep.mubr.f32.mxu0 0.0
      %2273 = vmatmul.mubr.f32.gmra.mxu0 %v1987
      %v2274 = vpop.f32.mrf.mxu0
      %v2275 = vadd.f32 %v1826, %v2274
      %v2276 = vpop.f32.mrf.mxu0
      %2277 = vmatprep.mubr.f32.mxu0 0.0
      %2278 = vmatmul.mubr.f32.gmra.mxu0 %v1990
      %v2279 = vpop.f32.mrf.mxu0
      %v2280 = vadd.f32 %v1831, %v2279
      %v2281 = vpop.f32.mrf.mxu0
      %2282 = vmatprep.mubr.f32.mxu0 0.0
      %2283 = vmatmul.mubr.f32.gmra.mxu0 %v1993
      %v2284 = vpop.f32.mrf.mxu0
      %v2285 = vadd.f32 %v1836, %v2284
      %v2286 = vpop.f32.mrf.mxu0
      %2287 = vmatprep.mubr.f32.mxu0 0.0
      %2288 = vmatmul.mubr.f32.gmra.mxu0 %v1996
      %v2289 = vpop.f32.mrf.mxu0
      %v2290 = vadd.f32 %v1841, %v2289
      %v2291 = vpop.f32.mrf.mxu0
      %2292 = vmatprep.mubr.f32.mxu0 0.0
      %2293 = vmatmul.mubr.f32.gmra.mxu0 %v1999
      %v2294 = vpop.f32.mrf.mxu0
      %v2295 = vadd.f32 %v1846, %v2294
      %v2296 = vpop.f32.mrf.mxu0
      %2297 = vmatprep.mubr.f32.mxu0 0.0
      %2298 = vmatmul.mubr.f32.gmra.mxu0 %v2002
      %v2299 = vpop.f32.mrf.mxu0
      %v2300 = vadd.f32 %v1851, %v2299
      %v2301 = vpop.f32.mrf.mxu0
      %2302 = vmatprep.mubr.f32.mxu0 0.0
      %2303 = vmatmul.mubr.f32.gmra.mxu0 %v2005
      %v2304 = vpop.f32.mrf.mxu0
      %v2305 = vadd.f32 %v1856, %v2304
      %v2306 = vpop.f32.mrf.mxu0
      %2307 = vmatprep.mubr.f32.mxu0 0.0
      %2308 = vmatmul.mubr.f32.gmra.mxu0 %v2008
      %v2309 = vpop.f32.mrf.mxu0
      %v2310 = vadd.f32 %v1861, %v2309
      %v2311 = vpop.f32.mrf.mxu0
      %2312 = vmatprep.mubr.f32.mxu0 0.0
      %2313 = vmatmul.mubr.f32.gmra.mxu0 %v2011
      %v2314 = vpop.f32.mrf.mxu0
      %v2315 = vadd.f32 %v1866, %v2314
      %v2316 = vpop.f32.mrf.mxu0
      %2317 = vdwg.mxu0
      %v2318 = vld [vmem:[%s6] sm:$0x1]
      %v2320 = vlaneseq
      %v2321 = vshrl.u32 %v2320, 7
      %v2322 = vsub.s32 0, %v2321
      %v2323 = vrot.slane %v2318, %v2322
      %v2325 = vadd.f32 %v2080, %v2323
      %v2326 = vadd.f32 %v2085, %v2323
      %v2327 = vadd.f32 %v2090, %v2323
      %v2328 = vadd.f32 %v2095, %v2323
      %v2329 = vadd.f32 %v2100, %v2323
      %v2330 = vadd.f32 %v2105, %v2323
      %v2331 = vadd.f32 %v2110, %v2323
      %v2332 = vadd.f32 %v2115, %v2323
      %v2333 = vadd.f32 %v2120, %v2323
      %v2334 = vadd.f32 %v2125, %v2323
      %v2335 = vadd.f32 %v2130, %v2323
      %v2336 = vadd.f32 %v2135, %v2323
      %v2337 = vadd.f32 %v2140, %v2323
      %v2338 = vadd.f32 %v2145, %v2323
      %v2339 = vadd.f32 %v2150, %v2323
      %v2340 = vadd.f32 %v2155, %v2323
      %v2341 = vadd.f32 %v2160, %v2323
      %v2342 = vadd.f32 %v2165, %v2323
      %v2343 = vadd.f32 %v2170, %v2323
      %v2344 = vadd.f32 %v2175, %v2323
      %v2345 = vadd.f32 %v2180, %v2323
      %v2346 = vadd.f32 %v2185, %v2323
      %v2347 = vadd.f32 %v2190, %v2323
      %v2348 = vadd.f32 %v2195, %v2323
      %v2349 = vadd.f32 %v2200, %v2323
      %v2350 = vadd.f32 %v2205, %v2323
      %v2351 = vadd.f32 %v2210, %v2323
      %v2352 = vadd.f32 %v2215, %v2323
      %v2353 = vadd.f32 %v2220, %v2323
      %v2354 = vadd.f32 %v2225, %v2323
      %v2355 = vadd.f32 %v2230, %v2323
      %v2356 = vadd.f32 %v2235, %v2323
      %v2357 = vadd.f32 %v2240, %v2323
      %v2358 = vadd.f32 %v2245, %v2323
      %v2359 = vadd.f32 %v2250, %v2323
      %v2360 = vadd.f32 %v2255, %v2323
      %v2361 = vadd.f32 %v2260, %v2323
      %v2362 = vadd.f32 %v2265, %v2323
      %v2363 = vadd.f32 %v2270, %v2323
      %v2364 = vadd.f32 %v2275, %v2323
      %v2365 = vadd.f32 %v2280, %v2323
      %v2366 = vadd.f32 %v2285, %v2323
      %v2367 = vadd.f32 %v2290, %v2323
      %v2368 = vadd.f32 %v2295, %v2323
      %v2369 = vadd.f32 %v2300, %v2323
      %v2370 = vadd.f32 %v2305, %v2323
      %v2371 = vadd.f32 %v2310, %v2323
      %v2372 = vadd.f32 %v2315, %v2323
      %v2373 = vxor.u32 %v2325, 2147483648
      %v2374 = vxor.u32 %v2326, 2147483648
      %v2375 = vxor.u32 %v2327, 2147483648
      %v2376 = vxor.u32 %v2328, 2147483648
      %v2377 = vxor.u32 %v2329, 2147483648
      %v2378 = vxor.u32 %v2330, 2147483648
      %v2379 = vxor.u32 %v2331, 2147483648
      %v2380 = vxor.u32 %v2332, 2147483648
      %v2381 = vxor.u32 %v2333, 2147483648
      %v2382 = vxor.u32 %v2334, 2147483648
      %v2383 = vxor.u32 %v2335, 2147483648
      %v2384 = vxor.u32 %v2336, 2147483648
      %v2385 = vxor.u32 %v2337, 2147483648
      %v2386 = vxor.u32 %v2338, 2147483648
      %v2387 = vxor.u32 %v2339, 2147483648
      %v2388 = vxor.u32 %v2340, 2147483648
      %v2389 = vxor.u32 %v2341, 2147483648
      %v2390 = vxor.u32 %v2342, 2147483648
      %v2391 = vxor.u32 %v2343, 2147483648
      %v2392 = vxor.u32 %v2344, 2147483648
      %v2393 = vxor.u32 %v2345, 2147483648
      %v2394 = vxor.u32 %v2346, 2147483648
      %v2395 = vxor.u32 %v2347, 2147483648
      %v2396 = vxor.u32 %v2348, 2147483648
      %v2397 = vxor.u32 %v2349, 2147483648
      %v2398 = vxor.u32 %v2350, 2147483648
      %v2399 = vxor.u32 %v2351, 2147483648
      %v2400 = vxor.u32 %v2352, 2147483648
      %v2401 = vxor.u32 %v2353, 2147483648
      %v2402 = vxor.u32 %v2354, 2147483648
      %v2403 = vxor.u32 %v2355, 2147483648
      %v2404 = vxor.u32 %v2356, 2147483648
      %v2405 = vxor.u32 %v2357, 2147483648
      %v2406 = vxor.u32 %v2358, 2147483648
      %v2407 = vxor.u32 %v2359, 2147483648
      %v2408 = vxor.u32 %v2360, 2147483648
      %v2409 = vxor.u32 %v2361, 2147483648
      %v2410 = vxor.u32 %v2362, 2147483648
      %v2411 = vxor.u32 %v2363, 2147483648
      %v2412 = vxor.u32 %v2364, 2147483648
      %v2413 = vxor.u32 %v2365, 2147483648
      %v2414 = vxor.u32 %v2366, 2147483648
      %v2415 = vxor.u32 %v2367, 2147483648
      %v2416 = vxor.u32 %v2368, 2147483648
      %v2417 = vxor.u32 %v2369, 2147483648
      %v2418 = vxor.u32 %v2370, 2147483648
      %v2419 = vxor.u32 %v2371, 2147483648
      %v2420 = vxor.u32 %v2372, 2147483648
      %v2421 = vmul.f32 %v2373, 1.442695
      %v2422 = vpow.pop %v2421
      %v2423 = vmul.f32 %v2374, 1.442695
      %v2424 = vpow.pop %v2423
      %v2425 = vmul.f32 %v2375, 1.442695
      %v2426 = vpow.pop %v2425
      %v2427 = vmul.f32 %v2376, 1.442695
      %v2428 = vpow.pop %v2427
      %v2429 = vmul.f32 %v2377, 1.442695
      %v2430 = vpow.pop %v2429
      %v2431 = vmul.f32 %v2378, 1.442695
      %v2432 = vpow.pop %v2431
      %v2433 = vmul.f32 %v2379, 1.442695
      %v2434 = vpow.pop %v2433
      %v2435 = vmul.f32 %v2380, 1.442695
      %v2436 = vpow.pop %v2435
      %v2437 = vmul.f32 %v2381, 1.442695
      %v2438 = vpow.pop %v2437
      %v2439 = vmul.f32 %v2382, 1.442695
      %v2440 = vpow.pop %v2439
      %v2441 = vmul.f32 %v2383, 1.442695
      %v2442 = vpow.pop %v2441
      %v2443 = vmul.f32 %v2384, 1.442695
      %v2444 = vpow.pop %v2443
      %v2445 = vmul.f32 %v2385, 1.442695
      %v2446 = vpow.pop %v2445
      %v2447 = vmul.f32 %v2386, 1.442695
      %v2448 = vpow.pop %v2447
      %v2449 = vmul.f32 %v2387, 1.442695
      %v2450 = vpow.pop %v2449
      %v2451 = vmul.f32 %v2388, 1.442695
      %v2452 = vpow.pop %v2451
      %v2453 = vmul.f32 %v2389, 1.442695
      %v2454 = vpow.pop %v2453
      %v2455 = vmul.f32 %v2390, 1.442695
      %v2456 = vpow.pop %v2455
      %v2457 = vmul.f32 %v2391, 1.442695
      %v2458 = vpow.pop %v2457
      %v2459 = vmul.f32 %v2392, 1.442695
      %v2460 = vpow.pop %v2459
      %v2461 = vmul.f32 %v2393, 1.442695
      %v2462 = vpow.pop %v2461
      %v2463 = vmul.f32 %v2394, 1.442695
      %v2464 = vpow.pop %v2463
      %v2465 = vmul.f32 %v2395, 1.442695
      %v2466 = vpow.pop %v2465
      %v2467 = vmul.f32 %v2396, 1.442695
      %v2468 = vpow.pop %v2467
      %v2469 = vmul.f32 %v2397, 1.442695
      %v2470 = vpow.pop %v2469
      %v2471 = vmul.f32 %v2398, 1.442695
      %v2472 = vpow.pop %v2471
      %v2473 = vmul.f32 %v2399, 1.442695
      %v2474 = vpow.pop %v2473
      %v2475 = vmul.f32 %v2400, 1.442695
      %v2476 = vpow.pop %v2475
      %v2477 = vmul.f32 %v2401, 1.442695
      %v2478 = vpow.pop %v2477
      %v2479 = vmul.f32 %v2402, 1.442695
      %v2480 = vpow.pop %v2479
      %v2481 = vmul.f32 %v2403, 1.442695
      %v2482 = vpow.pop %v2481
      %v2483 = vmul.f32 %v2404, 1.442695
      %v2484 = vpow.pop %v2483
      %v2485 = vmul.f32 %v2405, 1.442695
      %v2486 = vpow.pop %v2485
      %v2487 = vmul.f32 %v2406, 1.442695
      %v2488 = vpow.pop %v2487
      %v2489 = vmul.f32 %v2407, 1.442695
      %v2490 = vpow.pop %v2489
      %v2491 = vmul.f32 %v2408, 1.442695
      %v2492 = vpow.pop %v2491
      %v2493 = vmul.f32 %v2409, 1.442695
      %v2494 = vpow.pop %v2493
      %v2495 = vmul.f32 %v2410, 1.442695
      %v2496 = vpow.pop %v2495
      %v2497 = vmul.f32 %v2411, 1.442695
      %v2498 = vpow.pop %v2497
      %v2499 = vmul.f32 %v2412, 1.442695
      %v2500 = vpow.pop %v2499
      %v2501 = vmul.f32 %v2413, 1.442695
      %v2502 = vpow.pop %v2501
      %v2503 = vmul.f32 %v2414, 1.442695
      %v2504 = vpow.pop %v2503
      %v2505 = vmul.f32 %v2415, 1.442695
      %v2506 = vpow.pop %v2505
      %v2507 = vmul.f32 %v2416, 1.442695
      %v2508 = vpow.pop %v2507
      %v2509 = vmul.f32 %v2417, 1.442695
      %v2510 = vpow.pop %v2509
      %v2511 = vmul.f32 %v2418, 1.442695
      %v2512 = vpow.pop %v2511
      %v2513 = vmul.f32 %v2419, 1.442695
      %v2514 = vpow.pop %v2513
      %v2515 = vmul.f32 %v2420, 1.442695
      %v2516 = vpow.pop %v2515
      %v2517 = vadd.f32 %v2422, 1.0
      %v2518 = vadd.f32 %v2424, 1.0
      %v2519 = vadd.f32 %v2426, 1.0
      %v2520 = vadd.f32 %v2428, 1.0
      %v2521 = vadd.f32 %v2430, 1.0
      %v2522 = vadd.f32 %v2432, 1.0
      %v2523 = vadd.f32 %v2434, 1.0
      %v2524 = vadd.f32 %v2436, 1.0
      %v2525 = vadd.f32 %v2438, 1.0
      %v2526 = vadd.f32 %v2440, 1.0
      %v2527 = vadd.f32 %v2442, 1.0
      %v2528 = vadd.f32 %v2444, 1.0
      %v2529 = vadd.f32 %v2446, 1.0
      %v2530 = vadd.f32 %v2448, 1.0
      %v2531 = vadd.f32 %v2450, 1.0
      %v2532 = vadd.f32 %v2452, 1.0
      %v2533 = vadd.f32 %v2454, 1.0
      %v2534 = vadd.f32 %v2456, 1.0
      %v2535 = vadd.f32 %v2458, 1.0
      %v2536 = vadd.f32 %v2460, 1.0
      %v2537 = vadd.f32 %v2462, 1.0
      %v2538 = vadd.f32 %v2464, 1.0
      %v2539 = vadd.f32 %v2466, 1.0
      %v2540 = vadd.f32 %v2468, 1.0
      %v2541 = vadd.f32 %v2470, 1.0
      %v2542 = vadd.f32 %v2472, 1.0
      %v2543 = vadd.f32 %v2474, 1.0
      %v2544 = vadd.f32 %v2476, 1.0
      %v2545 = vadd.f32 %v2478, 1.0
      %v2546 = vadd.f32 %v2480, 1.0
      %v2547 = vadd.f32 %v2482, 1.0
      %v2548 = vadd.f32 %v2484, 1.0
      %v2549 = vadd.f32 %v2486, 1.0
      %v2550 = vadd.f32 %v2488, 1.0
      %v2551 = vadd.f32 %v2490, 1.0
      %v2552 = vadd.f32 %v2492, 1.0
      %v2553 = vadd.f32 %v2494, 1.0
      %v2554 = vadd.f32 %v2496, 1.0
      %v2555 = vadd.f32 %v2498, 1.0
      %v2556 = vadd.f32 %v2500, 1.0
      %v2557 = vadd.f32 %v2502, 1.0
      %v2558 = vadd.f32 %v2504, 1.0
      %v2559 = vadd.f32 %v2506, 1.0
      %v2560 = vadd.f32 %v2508, 1.0
      %v2561 = vadd.f32 %v2510, 1.0
      %v2562 = vadd.f32 %v2512, 1.0
      %v2563 = vadd.f32 %v2514, 1.0
      %v2564 = vadd.f32 %v2516, 1.0
      %v2565 = vrcp.pop %v2517
      %v2566 = vmul.f32 1.0, %v2565
      %v2567 = vrcp.pop %v2518
      %v2568 = vmul.f32 1.0, %v2567
      %v2569 = vrcp.pop %v2519
      %v2570 = vmul.f32 1.0, %v2569
      %v2571 = vrcp.pop %v2520
      %v2572 = vmul.f32 1.0, %v2571
      %v2573 = vrcp.pop %v2521
      %v2574 = vmul.f32 1.0, %v2573
      %v2575 = vrcp.pop %v2522
      %v2576 = vmul.f32 1.0, %v2575
      %v2577 = vrcp.pop %v2523
      %v2578 = vmul.f32 1.0, %v2577
      %v2579 = vrcp.pop %v2524
      %v2580 = vmul.f32 1.0, %v2579
      %v2581 = vrcp.pop %v2525
      %v2582 = vmul.f32 1.0, %v2581
      %v2583 = vrcp.pop %v2526
      %v2584 = vmul.f32 1.0, %v2583
      %v2585 = vrcp.pop %v2527
      %v2586 = vmul.f32 1.0, %v2585
      %v2587 = vrcp.pop %v2528
      %v2588 = vmul.f32 1.0, %v2587
      %v2589 = vrcp.pop %v2529
      %v2590 = vmul.f32 1.0, %v2589
      %v2591 = vrcp.pop %v2530
      %v2592 = vmul.f32 1.0, %v2591
      %v2593 = vrcp.pop %v2531
      %v2594 = vmul.f32 1.0, %v2593
      %v2595 = vrcp.pop %v2532
      %v2596 = vmul.f32 1.0, %v2595
      %v2597 = vrcp.pop %v2533
      %v2598 = vmul.f32 1.0, %v2597
      %v2599 = vrcp.pop %v2534
      %v2600 = vmul.f32 1.0, %v2599
      %v2601 = vrcp.pop %v2535
      %v2602 = vmul.f32 1.0, %v2601
      %v2603 = vrcp.pop %v2536
      %v2604 = vmul.f32 1.0, %v2603
      %v2605 = vrcp.pop %v2537
      %v2606 = vmul.f32 1.0, %v2605
      %v2607 = vrcp.pop %v2538
      %v2608 = vmul.f32 1.0, %v2607
      %v2609 = vrcp.pop %v2539
      %v2610 = vmul.f32 1.0, %v2609
      %v2611 = vrcp.pop %v2540
      %v2612 = vmul.f32 1.0, %v2611
      %v2613 = vrcp.pop %v2541
      %v2614 = vmul.f32 1.0, %v2613
      %v2615 = vrcp.pop %v2542
      %v2616 = vmul.f32 1.0, %v2615
      %v2617 = vrcp.pop %v2543
      %v2618 = vmul.f32 1.0, %v2617
      %v2619 = vrcp.pop %v2544
      %v2620 = vmul.f32 1.0, %v2619
      %v2621 = vrcp.pop %v2545
      %v2622 = vmul.f32 1.0, %v2621
      %v2623 = vrcp.pop %v2546
      %v2624 = vmul.f32 1.0, %v2623
      %v2625 = vrcp.pop %v2547
      %v2626 = vmul.f32 1.0, %v2625
      %v2627 = vrcp.pop %v2548
      %v2628 = vmul.f32 1.0, %v2627
      %v2629 = vrcp.pop %v2549
      %v2630 = vmul.f32 1.0, %v2629
      %v2631 = vrcp.pop %v2550
      %v2632 = vmul.f32 1.0, %v2631
      %v2633 = vrcp.pop %v2551
      %v2634 = vmul.f32 1.0, %v2633
      %v2635 = vrcp.pop %v2552
      %v2636 = vmul.f32 1.0, %v2635
      %v2637 = vrcp.pop %v2553
      %v2638 = vmul.f32 1.0, %v2637
      %v2639 = vrcp.pop %v2554
      %v2640 = vmul.f32 1.0, %v2639
      %v2641 = vrcp.pop %v2555
      %v2642 = vmul.f32 1.0, %v2641
      %v2643 = vrcp.pop %v2556
      %v2644 = vmul.f32 1.0, %v2643
      %v2645 = vrcp.pop %v2557
      %v2646 = vmul.f32 1.0, %v2645
      %v2647 = vrcp.pop %v2558
      %v2648 = vmul.f32 1.0, %v2647
      %v2649 = vrcp.pop %v2559
      %v2650 = vmul.f32 1.0, %v2649
      %v2651 = vrcp.pop %v2560
      %v2652 = vmul.f32 1.0, %v2651
      %v2653 = vrcp.pop %v2561
      %v2654 = vmul.f32 1.0, %v2653
      %v2655 = vrcp.pop %v2562
      %v2656 = vmul.f32 1.0, %v2655
      %v2657 = vrcp.pop %v2563
      %v2658 = vmul.f32 1.0, %v2657
      %v2659 = vrcp.pop %v2564
      %v2660 = vmul.f32 1.0, %v2659
      %2661 = vst [vmem:[#allocation3] sm:$0xff] %v2566
      %2662 = vst [vmem:[#allocation3 + $0x8] sm:$0xff] %v2568
      %2663 = vst [vmem:[#allocation3 + $0x10] sm:$0xff] %v2570
      %2664 = vst [vmem:[#allocation3 + $0x18] sm:$0xff] %v2572
      %2665 = vst [vmem:[#allocation3 + $0x20] sm:$0xff] %v2574
      %2666 = vst [vmem:[#allocation3 + $0x28] sm:$0xff] %v2576
      %2667 = vst [vmem:[#allocation3 + $0x30] sm:$0xff] %v2578
      %2668 = vst [vmem:[#allocation3 + $0x38] sm:$0xff] %v2580
      %2669 = vst [vmem:[#allocation3 + $0x40] sm:$0xff] %v2582
      %2670 = vst [vmem:[#allocation3 + $0x48] sm:$0xff] %v2584
      %2671 = vst [vmem:[#allocation3 + $0x50] sm:$0xff] %v2586
      %2672 = vst [vmem:[#allocation3 + $0x58] sm:$0xff] %v2588
      %2673 = vst [vmem:[#allocation3 + $0x60] sm:$0xff] %v2590
      %2674 = vst [vmem:[#allocation3 + $0x68] sm:$0xff] %v2592
      %2675 = vst [vmem:[#allocation3 + $0x70] sm:$0xff] %v2594
      %2676 = vst [vmem:[#allocation3 + $0x78] sm:$0xff] %v2596
      %2677 = vst [vmem:[#allocation3 + $0x80] sm:$0xff] %v2598
      %2678 = vst [vmem:[#allocation3 + $0x88] sm:$0xff] %v2600
      %2679 = vst [vmem:[#allocation3 + $0x90] sm:$0xff] %v2602
      %2680 = vst [vmem:[#allocation3 + $0x98] sm:$0xff] %v2604
      %2681 = vst [vmem:[#allocation3 + $0xa0] sm:$0xff] %v2606
      %2682 = vst [vmem:[#allocation3 + $0xa8] sm:$0xff] %v2608
      %2683 = vst [vmem:[#allocation3 + $0xb0] sm:$0xff] %v2610
      %2684 = vst [vmem:[#allocation3 + $0xb8] sm:$0xff] %v2612
      %2685 = vst [vmem:[#allocation3 + $0xc0] sm:$0xff] %v2614
      %2686 = vst [vmem:[#allocation3 + $0xc8] sm:$0xff] %v2616
      %2687 = vst [vmem:[#allocation3 + $0xd0] sm:$0xff] %v2618
      %2688 = vst [vmem:[#allocation3 + $0xd8] sm:$0xff] %v2620
      %2689 = vst [vmem:[#allocation3 + $0xe0] sm:$0xff] %v2622
      %2690 = vst [vmem:[#allocation3 + $0xe8] sm:$0xff] %v2624
      %2691 = vst [vmem:[#allocation3 + $0xf0] sm:$0xff] %v2626
      %2692 = vst [vmem:[#allocation3 + $0xf8] sm:$0xff] %v2628
      %2693 = vst [vmem:[#allocation3 + $0x100] sm:$0xff] %v2630
      %2694 = vst [vmem:[#allocation3 + $0x108] sm:$0xff] %v2632
      %2695 = vst [vmem:[#allocation3 + $0x110] sm:$0xff] %v2634
      %2696 = vst [vmem:[#allocation3 + $0x118] sm:$0xff] %v2636
      %2697 = vst [vmem:[#allocation3 + $0x120] sm:$0xff] %v2638
      %2698 = vst [vmem:[#allocation3 + $0x128] sm:$0xff] %v2640
      %2699 = vst [vmem:[#allocation3 + $0x130] sm:$0xff] %v2642
      %2700 = vst [vmem:[#allocation3 + $0x138] sm:$0xff] %v2644
      %2701 = vst [vmem:[#allocation3 + $0x140] sm:$0xff] %v2646
      %2702 = vst [vmem:[#allocation3 + $0x148] sm:$0xff] %v2648
      %2703 = vst [vmem:[#allocation3 + $0x150] sm:$0xff] %v2650
      %2704 = vst [vmem:[#allocation3 + $0x158] sm:$0xff] %v2652
      %2705 = vst [vmem:[#allocation3 + $0x160] sm:$0xff] %v2654
      %2706 = vst [vmem:[#allocation3 + $0x168] sm:$0xff] %v2656
      %2707 = vst [vmem:[#allocation3 + $0x170] sm:$0xff] %v2658
      %2708 = vst [vmem:[#allocation3 + $0x178] sm:$0xff] %v2660
    $region37: #{tpu_custom_call.1} parent=1 // pred_fallthru
      _
    // Predicated region
    $region38: #{tpu_custom_call.1} parent=1 // pred_check
      _
    $region39: #{tpu_custom_call.1} parent=1 // pred_check_branch
      %2710 = sbr.rel (0) target = $region41
    $region40: #{tpu_custom_call.1} parent=1 // pred_region
      %s2712 = ssub.s32 6144, 6144
      %2713 = vsyncadd [#allocation4], %s2712
      %s2714 = sshll.u32 [#allocation3], 4
      %s2715 = int_to_ptr.vmem [resolvable:$true] %s2714
      %2720 = dma.vmem_to_hbm [thread:$0]  %s2715, 6144, %s7, [#allocation4], 128, 128, 8
    $region41: #{tpu_custom_call.1} parent=1 // pred_fallthru
      _
    // Predicated region
    $region42: #{tpu_custom_call.1} parent=1 // pred_check
      _
    $region43: #{tpu_custom_call.1} parent=1 // pred_check_branch
      %2722 = sbr.rel (0) target = $region45
    $region44: #{tpu_custom_call.1} parent=1 // pred_region
      %2723 = dma.done [#allocation4], 6144
    $region45: #{tpu_custom_call.1} parent=1 // pred_fallthru
      _
    %2724 = vsyncpa [#allocation4], 1

</llo_original>
